<compile_context>
chip_gen: v6e
topology: v6e:2x2x1
jax: 0.10.0
libtpu: 0.0.40
codegen_flags: <defaults>
</compile_context>

<pallas_src>
from functools import partial

import jax
import jax.numpy as jnp
from jax.experimental import pallas as pl
from jax.experimental.pallas import tpu as pltpu


def _round_up(x, m):
    return ((x + m - 1) // m) * m


def _pad_to(x, shape):
    return jnp.pad(x, [(0, s - d) for d, s in zip(x.shape, shape)])


# ---------------------------------------------------------------------------
# Kernel: one (batch block, time block) tile of the recurrence.
# ---------------------------------------------------------------------------
def rnn_block_kernel(t_valid, n_valid_out, needs_t_mask, unroll,
                     exo_ref, h0_ref,
                     w_exo_ref, b_exo_ref, w_hh_ref, w_ho_ref,
                     w_o2oh_ref, w_o2oo_ref, b_o2o_ref,
                     out_ref, hfin_ref,
                     pre_h_buf, hprev_buf, hcur_buf, h_carry):
    t_idx = pl.program_id(1)
    Tt, B_BLK, CIp = exo_ref.shape
    Hp = w_hh_ref.shape[0]
    Op = w_o2oo_ref.shape[0]
    M = Tt * B_BLK

    # (Re)load the recurrent carry at the start of each batch block's time sweep.
    @pl.when(t_idx == 0)
    def _():
        h_carry[...] = h0_ref[...].astype(jnp.float32)

    # ---- Hoisted exogenous projections: i2h and i2o category/input blocks and
    #      both biases in ONE batched matmul with M = Tt*B_BLK rows.
    exo2d = exo_ref[...].reshape(M, CIp)
    precomp = (jnp.dot(exo2d.astype(w_exo_ref.dtype), w_exo_ref[...],
                       preferred_element_type=jnp.float32)
               + b_exo_ref[...])
    pre_h_buf[...] = precomp[:, :Hp].reshape(Tt, B_BLK, Hp)
    pre_o = precomp[:, Hp:]                       # (M, Op) — used after the loop

    # ---- Serial recurrence: only h_{t-1} @ W_hh is on the critical path.
    t0 = t_idx * Tt

    def step(i, h):
        hprev_buf[i] = h
        h_new = pre_h_buf[i] + jnp.dot(h.astype(w_hh_ref.dtype), w_hh_ref[...],
                                       preferred_element_type=jnp.float32)
        if needs_t_mask:
            # Freeze the carry on zero-padded timesteps past the real seq end.
            h_new = jnp.where(t0 + i < t_valid, h_new, h)
        hcur_buf[i] = h_new
        return h_new

    h_last = jax.lax.fori_loop(0, Tt, step, h_carry[...], unroll=unroll)
    h_carry[...] = h_last
    hfin_ref[...] = h_last.astype(hfin_ref.dtype)

    # ---- Batched epilogue for the whole time block (off the serial path).
    hprev = hprev_buf[...].reshape(M, Hp)         # h_{t-1} stack
    hcur = hcur_buf[...].reshape(M, Hp)           # h_t   stack
    out1 = pre_o + jnp.dot(hprev.astype(w_ho_ref.dtype), w_ho_ref[...],
                           preferred_element_type=jnp.float32)
    out2 = (jnp.dot(hcur.astype(w_o2oh_ref.dtype), w_o2oh_ref[...],
                    preferred_element_type=jnp.float32)
            + jnp.dot(out1.astype(w_o2oo_ref.dtype), w_o2oo_ref[...],
                      preferred_element_type=jnp.float32)
            + b_o2o_ref[...])

    # Dropout(0.1): identity in inference mode.
    # LogSoftmax(dim=1) restricted to the real (unpadded) output columns.
    col_valid = jax.lax.broadcasted_iota(jnp.int32, (1, Op), 1) < n_valid_out
    masked = jnp.where(col_valid, out2, jnp.float32(-1e30))
    m = jnp.max(masked, axis=1, keepdims=True)
    shifted = masked - m
    lse = jnp.log(jnp.sum(jnp.exp(shifted), axis=1, keepdims=True))
    out_ref[...] = (shifted - lse).reshape(Tt, B_BLK, Op).astype(out_ref.dtype)


# ---------------------------------------------------------------------------
# Wrappers
# ---------------------------------------------------------------------------
def rnn_forward_sequence(category_seq, input_seq, hidden0, packed, output_size,
                         *, t_block=16):
    """Run the RNN cell over a (T, B, ...) sequence.

    Returns (log_probs_seq (T, B, output_size), final_hidden (B, hidden_size)).
    """
    T, B, _ = category_seq.shape
    H = hidden0.shape[-1]

    CIp, HOp = packed["w_exo"].shape
    Hp = packed["w_hh"].shape[0]
    Op = packed["w_o2o_o"].shape[0]

    B_BLK = 8                                  # one f32 sublane tile per batch block
    Bp = _round_up(B, B_BLK)
    Tt = max(1, min(t_block, T))
    T_pad = _round_up(T, Tt)
    nb, nt = Bp // B_BLK, T_pad // Tt

    # Exogenous (category ++ input) stream, padded once, lane-dense.
    exo = jnp.concatenate(
        [category_seq.astype(jnp.float32), input_seq.astype(jnp.float32)], axis=-1)
    exo_p = _pad_to(exo, (T_pad, Bp, CIp))
    hid_p = _pad_to(hidden0.astype(jnp.float32), (Bp, Hp))

    # --- Cost / VMEM budgeting ---------------------------------------------
    M = Tt * B_BLK
    weight_bytes = sum(int(v.size) * v.dtype.itemsize for v in packed.values())
    flops = 2 * nb * nt * M * (CIp * HOp + Hp * Hp + 2 * Hp * Op + Op * Op)
    bytes_accessed = int(weight_bytes
                         + 4 * (exo_p.size + T_pad * Bp * Op + 2 * hid_p.size))
    cost = pl.CostEstimate(flops=int(flops),
                           transcendentals=int(nb * nt * M * (Op + 1)),
                           bytes_accessed=bytes_accessed)

    block_bytes = 4 * (Tt * B_BLK * (CIp + Op) + 2 * B_BLK * Hp)   # streamed blocks
    scratch_bytes = 4 * (3 * Tt * B_BLK * Hp + B_BLK * Hp)
    vmem_need = weight_bytes + 2 * block_bytes + scratch_bytes     # 2x double-buffer
    vmem_limit = int(min(max(4 * vmem_need, 16 << 20), 48 << 20))

    kernel = partial(rnn_block_kernel, T, output_size, T_pad != T, min(4, Tt))

    grid_spec = pltpu.PrefetchScalarGridSpec(
        num_scalar_prefetch=0,
        grid=(nb, nt),
        in_specs=[
            pl.BlockSpec((Tt, B_BLK, CIp), lambda b, t: (t, b, 0)),   # cat ++ inp
            pl.BlockSpec((B_BLK, Hp), lambda b, t: (b, 0)),           # h0
            pl.BlockSpec((CIp, HOp), lambda b, t: (0, 0)),            # W exo (i2h|i2o)
            pl.BlockSpec((1, HOp), lambda b, t: (0, 0)),              # b exo
            pl.BlockSpec((Hp, Hp), lambda b, t: (0, 0)),              # W_hh
            pl.BlockSpec((Hp, Op), lambda b, t: (0, 0)),              # W_ho (i2o hid)
            pl.BlockSpec((Hp, Op), lambda b, t: (0, 0)),              # W_o2o hid
            pl.BlockSpec((Op, Op), lambda b, t: (0, 0)),              # W_o2o out
            pl.BlockSpec((1, Op), lambda b, t: (0, 0)),               # b_o2o
        ],
        out_specs=(
            pl.BlockSpec((Tt, B_BLK, Op), lambda b, t: (t, b, 0)),    # log-probs
            pl.BlockSpec((B_BLK, Hp), lambda b, t: (b, 0)),           # final hidden
        ),
        scratch_shapes=[
            pltpu.VMEM((Tt, B_BLK, Hp), jnp.float32),   # hoisted i2h precompute
            pltpu.VMEM((Tt, B_BLK, Hp), jnp.float32),   # h_{t-1} stack
            pltpu.VMEM((Tt, B_BLK, Hp), jnp.float32),   # h_t stack
            pltpu.VMEM((B_BLK, Hp), jnp.float32),       # recurrent carry
        ],
    )

    out_p, hfin_p = pl.pallas_call(
        kernel,
        grid_spec=grid_spec,
        out_shape=(
            jax.ShapeDtypeStruct((T_pad, Bp, Op), jnp.float32),
            jax.ShapeDtypeStruct((Bp, Hp), jnp.float32),
        ),
        compiler_params=pltpu.CompilerParams(
            dimension_semantics=("parallel", "arbitrary"),
            vmem_limit_bytes=vmem_limit),
        cost_estimate=cost,
    )(exo_p, hid_p,
      packed["w_exo"], packed["b_exo"], packed["w_hh"], packed["w_ho"],
      packed["w_o2o_h"], packed["w_o2o_o"], packed["b_o2o"])

    return out_p[:T, :B, :output_size], hfin_p[:B, :H]


def rnn_forward(category, inp, hidden, packed, output_size):
    """Single-step API matching RNN.forward(category, input, hidden)."""
    out_seq, hidden_new = rnn_forward_sequence(
        category[None], inp[None], hidden, packed, output_size, t_block=1)
    return out_seq[0], hidden_new


# ---------------------------------------------------------------------------
# Parameters
# ---------------------------------------------------------------------------
def init_params(key, n_categories, input_size, hidden_size, output_size):
    """nn.Linear-style U(-1/sqrt(fan_in), 1/sqrt(fan_in)) init.
    Weights stored pre-transposed as (in_features, out_features)."""
    comb_in = n_categories + input_size + hidden_size
    o2o_in = hidden_size + output_size
    ks = jax.random.split(key, 6)

    def lin(kw, kb, fan_in, fan_out):
        bound = 1.0 / (fan_in ** 0.5)
        w = jax.random.uniform(kw, (fan_in, fan_out), jnp.float32, -bound, bound)
        b = jax.random.uniform(kb, (1, fan_out), jnp.float32, -bound, bound)
        return w, b

    w_i2h, b_i2h = lin(ks[0], ks[1], comb_in, hidden_size)
    w_i2o, b_i2o = lin(ks[2], ks[3], comb_in, output_size)
    w_o2o, b_o2o = lin(ks[4], ks[5], o2o_in, output_size)
    return {"w_i2h": w_i2h, "b_i2h": b_i2h,
            "w_i2o": w_i2o, "b_i2o": b_i2o,
            "w_o2o": w_o2o, "b_o2o": b_o2o}


def pack_params(p, n_categories, input_size, hidden_size, output_size,
                dtype=jnp.float32):
    """Split i2h/i2o/o2o into concat-blocks, merge the exogenous (category+input)
    projections of i2h and i2o column-wise, and zero-pad to lane-dense 128s.
    Use dtype=jnp.bfloat16 on v6e/v7x for 2x MXU throughput / half the DMA bytes."""
    C, I, H, O = n_categories, input_size, hidden_size, output_size
    CI = C + I
    CIp = _round_up(max(CI, 1), 128)
    Hp = _round_up(H, 128)
    Op = _round_up(O, 128)
    w_i2h, w_i2o, w_o2o = p["w_i2h"], p["w_i2o"], p["w_o2o"]

    w_exo = jnp.concatenate(
        [_pad_to(w_i2h[:CI], (CIp, Hp)), _pad_to(w_i2o[:CI], (CIp, Op))], axis=1)
    b_exo = jnp.concatenate(
        [_pad_to(p["b_i2h"], (1, Hp)), _pad_to(p["b_i2o"], (1, Op))], axis=1)
    return {
        "w_exo": w_exo.astype(dtype),
        "b_exo": b_exo.astype(jnp.float32),
        "w_hh": _pad_to(w_i2h[CI:], (Hp, Hp)).astype(dtype),
        "w_ho": _pad_to(w_i2o[CI:], (Hp, Op)).astype(dtype),
        "w_o2o_h": _pad_to(w_o2o[:H], (Hp, Op)).astype(dtype),
        "w_o2o_o": _pad_to(w_o2o[H:], (Op, Op)).astype(dtype),
        "b_o2o": _pad_to(p["b_o2o"], (1, Op)).astype(jnp.float32),
    }


# ---------------------------------------------------------------------------
# Pure-JAX reference (mirrors the PyTorch module exactly)
# ---------------------------------------------------------------------------
def reference_cell(category, inp, hidden, params):
    combined = jnp.concatenate((category, inp, hidden), axis=1)
    h = combined @ params["w_i2h"] + params["b_i2h"]
    o = combined @ params["w_i2o"] + params["b_i2o"]
    oc = jnp.concatenate((h, o), axis=1)
    o2 = oc @ params["w_o2o"] + params["b_o2o"]
    return jax.nn.log_softmax(o2, axis=1), h


if __name__ == "__main__":
    # NOTE: the original script has n_categories = len(all_categories) = 0,
    # which is degenerate; we pick a small nonzero n_categories to exercise
    # the concat path.  The __init__ shape formulas are honored exactly.
    n_categories, input_size, hidden_size, output_size = 4, 16, 32, 16
    B, T = 2, 8

    key = jax.random.PRNGKey(0)
    k_par, k_cat, k_in = jax.random.split(key, 3)
    params = init_params(k_par, n_categories, input_size, hidden_size, output_size)
    packed = pack_params(params, n_categories, input_size, hidden_size, output_size)

    cat_ids = jax.random.randint(k_cat, (T, B), 0, n_categories)
    category_seq = jax.nn.one_hot(cat_ids, n_categories).astype(jnp.float32)
    input_seq = jax.random.normal(k_in, (T, B, input_size), jnp.float32)
    hidden0 = jnp.zeros((B, hidden_size), jnp.float32)   # initHidden()

    # Full-sequence kernel; t_block=4 -> grid=(1, 2) exercises the carried
    # hidden scratch across pipelined time blocks.
    out_seq, hid_final = rnn_forward_sequence(
        category_seq, input_seq, hidden0, packed, output_size, t_block=4)
    jax.block_until_ready((out_seq, hid_final))

    # Single-step call matching RNN.forward semantics.
    out_step, hid_step = rnn_forward(
        category_seq[0], input_seq[0], hidden0, packed, output_size)
    jax.block_until_ready((out_step, hid_step))

    # Reference: per-step loop of the exact PyTorch math.
    ref_outs = []
    h = hidden0
    for t in range(T):
        o, h = reference_cell(category_seq[t], input_seq[t], h, params)
        ref_outs.append(o)
    ref_out_seq = jnp.stack(ref_outs)
    ref_hid_final = h

    assert jnp.allclose(out_seq, ref_out_seq, atol=1e-4), "sequence log_softmax mismatch"
    assert jnp.allclose(hid_final, ref_hid_final, atol=1e-4), "final hidden mismatch"

    ref_o0, ref_h0 = reference_cell(category_seq[0], input_seq[0], hidden0, params)
    assert jnp.allclose(out_step, ref_o0, atol=1e-4), "single-step output mismatch"
    assert jnp.allclose(hid_step, ref_h0, atol=1e-4), "single-step hidden mismatch"

    print("KERNEL_OK")
</pallas_src>

<mosaic_0001>
module attributes {stable_mosaic.version = 11 : i64} {
  func.func @rnn_block_kernel(%arg0: i32, %arg1: i32, %arg2: memref<4x8x128xf32, #tpu.memory_space<vmem>>, %arg3: memref<8x128xf32, #tpu.memory_space<vmem>>, %arg4: memref<128x256xf32, #tpu.memory_space<vmem>>, %arg5: memref<1x256xf32, #tpu.memory_space<vmem>>, %arg6: memref<128x128xf32, #tpu.memory_space<vmem>>, %arg7: memref<128x128xf32, #tpu.memory_space<vmem>>, %arg8: memref<128x128xf32, #tpu.memory_space<vmem>>, %arg9: memref<128x128xf32, #tpu.memory_space<vmem>>, %arg10: memref<1x128xf32, #tpu.memory_space<vmem>>, %arg11: memref<4x8x128xf32, #tpu.memory_space<vmem>>, %arg12: memref<8x128xf32, #tpu.memory_space<vmem>>, %arg13: memref<4x8x128xf32, #tpu.memory_space<vmem>>, %arg14: memref<4x8x128xf32, #tpu.memory_space<vmem>>, %arg15: memref<4x8x128xf32, #tpu.memory_space<vmem>>, %arg16: memref<8x128xf32, #tpu.memory_space<vmem>>) attributes {dimension_semantics = [#tpu.dimension_semantics<parallel>, #tpu.dimension_semantics<arbitrary>], iteration_bounds = array<i64: 1, 2>, scalar_prefetch = 0 : i64, scratch_operands = 4 : i64, tpu.core_type = #tpu.core_type<tc>, window_params = [{transform_indices = @transform_0, window_bounds = array<i64: 4, 8, 128>}, {transform_indices = @transform_1, window_bounds = array<i64: 8, 128>}, {pipeline_mode = #tpu.pipeline_mode<synchronous>, transform_indices = @transform_2, window_bounds = array<i64: 128, 256>}, {pipeline_mode = #tpu.pipeline_mode<synchronous>, transform_indices = @transform_3, window_bounds = array<i64: 1, 256>}, {pipeline_mode = #tpu.pipeline_mode<synchronous>, transform_indices = @transform_4, window_bounds = array<i64: 128, 128>}, {pipeline_mode = #tpu.pipeline_mode<synchronous>, transform_indices = @transform_5, window_bounds = array<i64: 128, 128>}, {pipeline_mode = #tpu.pipeline_mode<synchronous>, transform_indices = @transform_6, window_bounds = array<i64: 128, 128>}, {pipeline_mode = #tpu.pipeline_mode<synchronous>, transform_indices = @transform_7, window_bounds = array<i64: 128, 128>}, {pipeline_mode = #tpu.pipeline_mode<synchronous>, transform_indices = @transform_8, window_bounds = array<i64: 1, 128>}, {transform_indices = @transform_9, window_bounds = array<i64: 4, 8, 128>}, {transform_indices = @transform_10, window_bounds = array<i64: 8, 128>}]} {
    %c0_i32 = arith.constant 0 : i32
    %0 = arith.cmpi eq, %arg1, %c0_i32 : i32
    %1 = arith.extui %0 : i1 to i32
    %c0_i32_0 = arith.constant 0 : i32
    %2 = arith.cmpi ne, %1, %c0_i32_0 : i32
    scf.if %2 {
      %c0_76 = arith.constant 0 : index
      %c0_77 = arith.constant 0 : index
      %107 = vector.load %arg3[%c0_76, %c0_77] : memref<8x128xf32, #tpu.memory_space<vmem>>, vector<8x128xf32>
      %c0_78 = arith.constant 0 : index
      %c0_79 = arith.constant 0 : index
      %108 = vector.load %arg16[%c0_78, %c0_79] : memref<8x128xf32, #tpu.memory_space<vmem>>, vector<8x128xf32>
      tpu.vector_store %arg16[%c0_78, %c0_79], %107 {strides = array<i32>} : memref<8x128xf32, #tpu.memory_space<vmem>>, vector<8x128xf32>,
    } else {
    }
    %c0 = arith.constant 0 : index
    %c0_1 = arith.constant 0 : index
    %c0_2 = arith.constant 0 : index
    %3 = vector.load %arg2[%c0, %c0_1, %c0_2] : memref<4x8x128xf32, #tpu.memory_space<vmem>>, vector<4x8x128xf32>
    %4 = vector.shape_cast %3 : vector<4x8x128xf32> to vector<32x128xf32>
    %c0_3 = arith.constant 0 : index
    %c0_4 = arith.constant 0 : index
    %5 = vector.load %arg4[%c0_3, %c0_4] : memref<128x256xf32, #tpu.memory_space<vmem>>, vector<128x256xf32>
    %cst = arith.constant dense<0.000000e+00> : vector<32x256xf32>
    %6 = tpu.matmul %4, %5, %cst {dimension_numbers = #tpu.dot_dimension_numbers<[1], [0], [0], [1], [0, 0, 1, 1], [], []>} : vector<32x128xf32>, vector<128x256xf32>, vector<32x256xf32> -> vector<32x256xf32>
    %c0_5 = arith.constant 0 : index
    %c0_6 = arith.constant 0 : index
    %7 = vector.load %arg5[%c0_5, %c0_6] : memref<1x256xf32, #tpu.memory_space<vmem>>, vector<1x256xf32>
    %8 = vector.broadcast %7 : vector<1x256xf32> to vector<32x256xf32>
    %9 = arith.addf %6, %8 : vector<32x256xf32>
    %10 = vector.extract_strided_slice %9 {offsets = [0, 0], sizes = [32, 128], strides = [1, 1]} : vector<32x256xf32> to vector<32x128xf32>
    %11 = vector.shape_cast %10 : vector<32x128xf32> to vector<4x8x128xf32>
    %c0_7 = arith.constant 0 : index
    %c0_8 = arith.constant 0 : index
    %c0_9 = arith.constant 0 : index
    %12 = vector.load %arg13[%c0_7, %c0_8, %c0_9] : memref<4x8x128xf32, #tpu.memory_space<vmem>>, vector<4x8x128xf32>
    tpu.vector_store %arg13[%c0_7, %c0_8, %c0_9], %11 {strides = array<i32>} : memref<4x8x128xf32, #tpu.memory_space<vmem>>, vector<4x8x128xf32>,
    %13 = vector.extract_strided_slice %9 {offsets = [0, 128], sizes = [32, 128], strides = [1, 1]} : vector<32x256xf32> to vector<32x128xf32>
    %c0_10 = arith.constant 0 : index
    %c0_11 = arith.constant 0 : index
    %14 = vector.load %arg16[%c0_10, %c0_11] : memref<8x128xf32, #tpu.memory_space<vmem>>, vector<8x128xf32>
    %c0_i32_12 = arith.constant 0 : i32
    %15 = arith.index_cast %c0_i32_12 : i32 to index
    %c0_13 = arith.constant 0 : index
    %c0_14 = arith.constant 0 : index
    %16 = vector.load %arg14[%15, %c0_13, %c0_14] : memref<4x8x128xf32, #tpu.memory_space<vmem>>, vector<1x8x128xf32>
    %17 = vector.shape_cast %16 : vector<1x8x128xf32> to vector<8x128xf32>
    %18 = vector.shape_cast %14 : vector<8x128xf32> to vector<1x8x128xf32>
    tpu.vector_store %arg14[%15, %c0_13, %c0_14], %18 {strides = array<i32>} : memref<4x8x128xf32, #tpu.memory_space<vmem>>, vector<1x8x128xf32>,
    %19 = arith.index_cast %c0_i32_12 : i32 to index
    %c0_15 = arith.constant 0 : index
    %c0_16 = arith.constant 0 : index
    %20 = vector.load %arg13[%19, %c0_15, %c0_16] : memref<4x8x128xf32, #tpu.memory_space<vmem>>, vector<1x8x128xf32>
    %21 = vector.shape_cast %20 : vector<1x8x128xf32> to vector<8x128xf32>
    %c0_17 = arith.constant 0 : index
    %c0_18 = arith.constant 0 : index
    %22 = vector.load %arg6[%c0_17, %c0_18] : memref<128x128xf32, #tpu.memory_space<vmem>>, vector<128x128xf32>
    %cst_19 = arith.constant dense<0.000000e+00> : vector<8x128xf32>
    %23 = tpu.matmul %14, %22, %cst_19 {dimension_numbers = #tpu.dot_dimension_numbers<[1], [0], [0], [1], [0, 0, 1, 1], [], []>} : vector<8x128xf32>, vector<128x128xf32>, vector<8x128xf32> -> vector<8x128xf32>
    %24 = arith.addf %21, %23 : vector<8x128xf32>
    %25 = arith.index_cast %c0_i32_12 : i32 to index
    %c0_20 = arith.constant 0 : index
    %c0_21 = arith.constant 0 : index
    %26 = vector.load %arg15[%25, %c0_20, %c0_21] : memref<4x8x128xf32, #tpu.memory_space<vmem>>, vector<1x8x128xf32>
    %27 = vector.shape_cast %26 : vector<1x8x128xf32> to vector<8x128xf32>
    %28 = vector.shape_cast %24 : vector<8x128xf32> to vector<1x8x128xf32>
    tpu.vector_store %arg15[%25, %c0_20, %c0_21], %28 {strides = array<i32>} : memref<4x8x128xf32, #tpu.memory_space<vmem>>, vector<1x8x128xf32>,
    %c1_i32 = arith.constant 1 : i32
    %29 = arith.index_cast %c1_i32 : i32 to index
    %c0_22 = arith.constant 0 : index
    %c0_23 = arith.constant 0 : index
    %30 = vector.load %arg14[%29, %c0_22, %c0_23] : memref<4x8x128xf32, #tpu.memory_space<vmem>>, vector<1x8x128xf32>
    %31 = vector.shape_cast %30 : vector<1x8x128xf32> to vector<8x128xf32>
    %32 = vector.shape_cast %24 : vector<8x128xf32> to vector<1x8x128xf32>
    tpu.vector_store %arg14[%29, %c0_22, %c0_23], %32 {strides = array<i32>} : memref<4x8x128xf32, #tpu.memory_space<vmem>>, vector<1x8x128xf32>,
    %33 = arith.index_cast %c1_i32 : i32 to index
    %c0_24 = arith.constant 0 : index
    %c0_25 = arith.constant 0 : index
    %34 = vector.load %arg13[%33, %c0_24, %c0_25] : memref<4x8x128xf32, #tpu.memory_space<vmem>>, vector<1x8x128xf32>
    %35 = vector.shape_cast %34 : vector<1x8x128xf32> to vector<8x128xf32>
    %c0_26 = arith.constant 0 : index
    %c0_27 = arith.constant 0 : index
    %36 = vector.load %arg6[%c0_26, %c0_27] : memref<128x128xf32, #tpu.memory_space<vmem>>, vector<128x128xf32>
    %cst_28 = arith.constant dense<0.000000e+00> : vector<8x128xf32>
    %37 = tpu.matmul %24, %36, %cst_28 {dimension_numbers = #tpu.dot_dimension_numbers<[1], [0], [0], [1], [0, 0, 1, 1], [], []>} : vector<8x128xf32>, vector<128x128xf32>, vector<8x128xf32> -> vector<8x128xf32>
    %38 = arith.addf %35, %37 : vector<8x128xf32>
    %39 = arith.index_cast %c1_i32 : i32 to index
    %c0_29 = arith.constant 0 : index
    %c0_30 = arith.constant 0 : index
    %40 = vector.load %arg15[%39, %c0_29, %c0_30] : memref<4x8x128xf32, #tpu.memory_space<vmem>>, vector<1x8x128xf32>
    %41 = vector.shape_cast %40 : vector<1x8x128xf32> to vector<8x128xf32>
    %42 = vector.shape_cast %38 : vector<8x128xf32> to vector<1x8x128xf32>
    tpu.vector_store %arg15[%39, %c0_29, %c0_30], %42 {strides = array<i32>} : memref<4x8x128xf32, #tpu.memory_space<vmem>>, vector<1x8x128xf32>,
    %c2_i32 = arith.constant 2 : i32
    %43 = arith.index_cast %c2_i32 : i32 to index
    %c0_31 = arith.constant 0 : index
    %c0_32 = arith.constant 0 : index
    %44 = vector.load %arg14[%43, %c0_31, %c0_32] : memref<4x8x128xf32, #tpu.memory_space<vmem>>, vector<1x8x128xf32>
    %45 = vector.shape_cast %44 : vector<1x8x128xf32> to vector<8x128xf32>
    %46 = vector.shape_cast %38 : vector<8x128xf32> to vector<1x8x128xf32>
    tpu.vector_store %arg14[%43, %c0_31, %c0_32], %46 {strides = array<i32>} : memref<4x8x128xf32, #tpu.memory_space<vmem>>, vector<1x8x128xf32>,
    %47 = arith.index_cast %c2_i32 : i32 to index
    %c0_33 = arith.constant 0 : index
    %c0_34 = arith.constant 0 : index
    %48 = vector.load %arg13[%47, %c0_33, %c0_34] : memref<4x8x128xf32, #tpu.memory_space<vmem>>, vector<1x8x128xf32>
    %49 = vector.shape_cast %48 : vector<1x8x128xf32> to vector<8x128xf32>
    %c0_35 = arith.constant 0 : index
    %c0_36 = arith.constant 0 : index
    %50 = vector.load %arg6[%c0_35, %c0_36] : memref<128x128xf32, #tpu.memory_space<vmem>>, vector<128x128xf32>
    %cst_37 = arith.constant dense<0.000000e+00> : vector<8x128xf32>
    %51 = tpu.matmul %38, %50, %cst_37 {dimension_numbers = #tpu.dot_dimension_numbers<[1], [0], [0], [1], [0, 0, 1, 1], [], []>} : vector<8x128xf32>, vector<128x128xf32>, vector<8x128xf32> -> vector<8x128xf32>
    %52 = arith.addf %49, %51 : vector<8x128xf32>
    %53 = arith.index_cast %c2_i32 : i32 to index
    %c0_38 = arith.constant 0 : index
    %c0_39 = arith.constant 0 : index
    %54 = vector.load %arg15[%53, %c0_38, %c0_39] : memref<4x8x128xf32, #tpu.memory_space<vmem>>, vector<1x8x128xf32>
    %55 = vector.shape_cast %54 : vector<1x8x128xf32> to vector<8x128xf32>
    %56 = vector.shape_cast %52 : vector<8x128xf32> to vector<1x8x128xf32>
    tpu.vector_store %arg15[%53, %c0_38, %c0_39], %56 {strides = array<i32>} : memref<4x8x128xf32, #tpu.memory_space<vmem>>, vector<1x8x128xf32>,
    %c3_i32 = arith.constant 3 : i32
    %57 = arith.index_cast %c3_i32 : i32 to index
    %c0_40 = arith.constant 0 : index
    %c0_41 = arith.constant 0 : index
    %58 = vector.load %arg14[%57, %c0_40, %c0_41] : memref<4x8x128xf32, #tpu.memory_space<vmem>>, vector<1x8x128xf32>
    %59 = vector.shape_cast %58 : vector<1x8x128xf32> to vector<8x128xf32>
    %60 = vector.shape_cast %52 : vector<8x128xf32> to vector<1x8x128xf32>
    tpu.vector_store %arg14[%57, %c0_40, %c0_41], %60 {strides = array<i32>} : memref<4x8x128xf32, #tpu.memory_space<vmem>>, vector<1x8x128xf32>,
    %61 = arith.index_cast %c3_i32 : i32 to index
    %c0_42 = arith.constant 0 : index
    %c0_43 = arith.constant 0 : index
    %62 = vector.load %arg13[%61, %c0_42, %c0_43] : memref<4x8x128xf32, #tpu.memory_space<vmem>>, vector<1x8x128xf32>
    %63 = vector.shape_cast %62 : vector<1x8x128xf32> to vector<8x128xf32>
    %c0_44 = arith.constant 0 : index
    %c0_45 = arith.constant 0 : index
    %64 = vector.load %arg6[%c0_44, %c0_45] : memref<128x128xf32, #tpu.memory_space<vmem>>, vector<128x128xf32>
    %cst_46 = arith.constant dense<0.000000e+00> : vector<8x128xf32>
    %65 = tpu.matmul %52, %64, %cst_46 {dimension_numbers = #tpu.dot_dimension_numbers<[1], [0], [0], [1], [0, 0, 1, 1], [], []>} : vector<8x128xf32>, vector<128x128xf32>, vector<8x128xf32> -> vector<8x128xf32>
    %66 = arith.addf %63, %65 : vector<8x128xf32>
    %67 = arith.index_cast %c3_i32 : i32 to index
    %c0_47 = arith.constant 0 : index
    %c0_48 = arith.constant 0 : index
    %68 = vector.load %arg15[%67, %c0_47, %c0_48] : memref<4x8x128xf32, #tpu.memory_space<vmem>>, vector<1x8x128xf32>
    %69 = vector.shape_cast %68 : vector<1x8x128xf32> to vector<8x128xf32>
    %70 = vector.shape_cast %66 : vector<8x128xf32> to vector<1x8x128xf32>
    tpu.vector_store %arg15[%67, %c0_47, %c0_48], %70 {strides = array<i32>} : memref<4x8x128xf32, #tpu.memory_space<vmem>>, vector<1x8x128xf32>,
    %c4_i32 = arith.constant 4 : i32
    %c0_49 = arith.constant 0 : index
    %c0_50 = arith.constant 0 : index
    %71 = vector.load %arg16[%c0_49, %c0_50] : memref<8x128xf32, #tpu.memory_space<vmem>>, vector<8x128xf32>
    tpu.vector_store %arg16[%c0_49, %c0_50], %66 {strides = array<i32>} : memref<8x128xf32, #tpu.memory_space<vmem>>, vector<8x128xf32>,
    %c0_51 = arith.constant 0 : index
    %c0_52 = arith.constant 0 : index
    %72 = vector.load %arg12[%c0_51, %c0_52] : memref<8x128xf32, #tpu.memory_space<vmem>>, vector<8x128xf32>
    tpu.vector_store %arg12[%c0_51, %c0_52], %66 {strides = array<i32>} : memref<8x128xf32, #tpu.memory_space<vmem>>, vector<8x128xf32>,
    %c0_53 = arith.constant 0 : index
    %c0_54 = arith.constant 0 : index
    %c0_55 = arith.constant 0 : index
    %73 = vector.load %arg14[%c0_53, %c0_54, %c0_55] : memref<4x8x128xf32, #tpu.memory_space<vmem>>, vector<4x8x128xf32>
    %74 = vector.shape_cast %73 : vector<4x8x128xf32> to vector<32x128xf32>
    %c0_56 = arith.constant 0 : index
    %c0_57 = arith.constant 0 : index
    %c0_58 = arith.constant 0 : index
    %75 = vector.load %arg15[%c0_56, %c0_57, %c0_58] : memref<4x8x128xf32, #tpu.memory_space<vmem>>, vector<4x8x128xf32>
    %76 = vector.shape_cast %75 : vector<4x8x128xf32> to vector<32x128xf32>
    %c0_59 = arith.constant 0 : index
    %c0_60 = arith.constant 0 : index
    %77 = vector.load %arg7[%c0_59, %c0_60] : memref<128x128xf32, #tpu.memory_space<vmem>>, vector<128x128xf32>
    %cst_61 = arith.constant dense<0.000000e+00> : vector<32x128xf32>
    %78 = tpu.matmul %74, %77, %cst_61 {dimension_numbers = #tpu.dot_dimension_numbers<[1], [0], [0], [1], [0, 0, 1, 1], [], []>} : vector<32x128xf32>, vector<128x128xf32>, vector<32x128xf32> -> vector<32x128xf32>
    %79 = arith.addf %13, %78 : vector<32x128xf32>
    %c0_62 = arith.constant 0 : index
    %c0_63 = arith.constant 0 : index
    %80 = vector.load %arg8[%c0_62, %c0_63] : memref<128x128xf32, #tpu.memory_space<vmem>>, vector<128x128xf32>
    %cst_64 = arith.constant dense<0.000000e+00> : vector<32x128xf32>
    %81 = tpu.matmul %76, %80, %cst_64 {dimension_numbers = #tpu.dot_dimension_numbers<[1], [0], [0], [1], [0, 0, 1, 1], [], []>} : vector<32x128xf32>, vector<128x128xf32>, vector<32x128xf32> -> vector<32x128xf32>
    %c0_65 = arith.constant 0 : index
    %c0_66 = arith.constant 0 : index
    %82 = vector.load %arg9[%c0_65, %c0_66] : memref<128x128xf32, #tpu.memory_space<vmem>>, vector<128x128xf32>
    %cst_67 = arith.constant dense<0.000000e+00> : vector<32x128xf32>
    %83 = tpu.matmul %79, %82, %cst_67 {dimension_numbers = #tpu.dot_dimension_numbers<[1], [0], [0], [1], [0, 0, 1, 1], [], []>} : vector<32x128xf32>, vector<128x128xf32>, vector<32x128xf32> -> vector<32x128xf32>
    %84 = arith.addf %81, %83 : vector<32x128xf32>
    %c0_68 = arith.constant 0 : index
    %c0_69 = arith.constant 0 : index
    %85 = vector.load %arg10[%c0_68, %c0_69] : memref<1x128xf32, #tpu.memory_space<vmem>>, vector<1x128xf32>
    %86 = vector.broadcast %85 : vector<1x128xf32> to vector<32x128xf32>
    %87 = arith.addf %84, %86 : vector<32x128xf32>
    %88 = tpu.iota {dimensions = array<i32: 1>} : vector<1x128xi32>
    %c16_i32 = arith.constant 16 : i32
    %89 = vector.broadcast %c16_i32 : i32 to vector<1x128xi32>
    %90 = arith.cmpi slt, %88, %89 : vector<1x128xi32>
    %cst_70 = arith.constant -1.000000e+30 : f32
    %91 = vector.shape_cast %90 : vector<1x128xi1> to vector<1x128xi1>
    %92 = vector.broadcast %91 : vector<1x128xi1> to vector<32x128xi1>
    %93 = vector.broadcast %cst_70 : f32 to vector<32x128xf32>
    %94 = arith.select %92, %87, %93 : vector<32x128xi1>, vector<32x128xf32>
    %cst_71 = arith.constant dense<0xFF800000> : vector<32xf32>
    %95 = vector.multi_reduction <maximumf>, %94, %cst_71 [1] : vector<32x128xf32> to vector<32xf32>
    %96 = vector.shape_cast %95 : vector<32xf32> to vector<32x1xf32>
    %97 = vector.broadcast %96 : vector<32x1xf32> to vector<32x128xf32>
    %98 = arith.subf %94, %97 : vector<32x128xf32>
    %99 = math.exp %98 : vector<32x128xf32>
    %cst_72 = arith.constant dense<0.000000e+00> : vector<32xf32>
    %100 = vector.multi_reduction <add>, %99, %cst_72 [1] : vector<32x128xf32> to vector<32xf32>
    %101 = vector.shape_cast %100 : vector<32xf32> to vector<32x1xf32>
    %102 = math.log %101 : vector<32x1xf32>
    %103 = vector.broadcast %102 : vector<32x1xf32> to vector<32x128xf32>
    %104 = arith.subf %98, %103 : vector<32x128xf32>
    %105 = vector.shape_cast %104 : vector<32x128xf32> to vector<4x8x128xf32>
    %c0_73 = arith.constant 0 : index
    %c0_74 = arith.constant 0 : index
    %c0_75 = arith.constant 0 : index
    %106 = vector.load %arg11[%c0_73, %c0_74, %c0_75] : memref<4x8x128xf32, #tpu.memory_space<vmem>>, vector<4x8x128xf32>
    tpu.vector_store %arg11[%c0_73, %c0_74, %c0_75], %105 {strides = array<i32>} : memref<4x8x128xf32, #tpu.memory_space<vmem>>, vector<4x8x128xf32>,
    return
  }
  func.func @transform_0(%arg0: i32, %arg1: i32) -> (i32, i32, i32) {
    %c0_i32 = arith.constant 0 : i32
    %c0_i32_0 = arith.constant 0 : i32
    return %arg1, %arg0, %c0_i32 : i32, i32, i32
  }
  func.func @transform_1(%arg0: i32, %arg1: i32) -> (i32, i32) {
    %c0_i32 = arith.constant 0 : i32
    %c0_i32_0 = arith.constant 0 : i32
    return %arg0, %c0_i32 : i32, i32
  }
  func.func @transform_2(%arg0: i32, %arg1: i32) -> (i32, i32) {
    %c0_i32 = arith.constant 0 : i32
    %c0_i32_0 = arith.constant 0 : i32
    %c0_i32_1 = arith.constant 0 : i32
    return %c0_i32, %c0_i32_0 : i32, i32
  }
  func.func @transform_3(%arg0: i32, %arg1: i32) -> (i32, i32) {
    %c0_i32 = arith.constant 0 : i32
    %c0_i32_0 = arith.constant 0 : i32
    %c0_i32_1 = arith.constant 0 : i32
    return %c0_i32, %c0_i32_0 : i32, i32
  }
  func.func @transform_4(%arg0: i32, %arg1: i32) -> (i32, i32) {
    %c0_i32 = arith.constant 0 : i32
    %c0_i32_0 = arith.constant 0 : i32
    %c0_i32_1 = arith.constant 0 : i32
    return %c0_i32, %c0_i32_0 : i32, i32
  }
  func.func @transform_5(%arg0: i32, %arg1: i32) -> (i32, i32) {
    %c0_i32 = arith.constant 0 : i32
    %c0_i32_0 = arith.constant 0 : i32
    %c0_i32_1 = arith.constant 0 : i32
    return %c0_i32, %c0_i32_0 : i32, i32
  }
  func.func @transform_6(%arg0: i32, %arg1: i32) -> (i32, i32) {
    %c0_i32 = arith.constant 0 : i32
    %c0_i32_0 = arith.constant 0 : i32
    %c0_i32_1 = arith.constant 0 : i32
    return %c0_i32, %c0_i32_0 : i32, i32
  }
  func.func @transform_7(%arg0: i32, %arg1: i32) -> (i32, i32) {
    %c0_i32 = arith.constant 0 : i32
    %c0_i32_0 = arith.constant 0 : i32
    %c0_i32_1 = arith.constant 0 : i32
    return %c0_i32, %c0_i32_0 : i32, i32
  }
  func.func @transform_8(%arg0: i32, %arg1: i32) -> (i32, i32) {
    %c0_i32 = arith.constant 0 : i32
    %c0_i32_0 = arith.constant 0 : i32
    %c0_i32_1 = arith.constant 0 : i32
    return %c0_i32, %c0_i32_0 : i32, i32
  }
  func.func @transform_9(%arg0: i32, %arg1: i32) -> (i32, i32, i32) {
    %c0_i32 = arith.constant 0 : i32
    %c0_i32_0 = arith.constant 0 : i32
    return %arg1, %arg0, %c0_i32 : i32, i32, i32
  }
  func.func @transform_10(%arg0: i32, %arg1: i32) -> (i32, i32) {
    %c0_i32 = arith.constant 0 : i32
    %c0_i32_0 = arith.constant 0 : i32
    return %arg0, %c0_i32 : i32, i32
  }
}

</mosaic_0001>

<llo_original>
// kernel: tpu_custom_call.1
$region0: #{tpu_custom_call.1}
  #allocation0 [shape = 'u32[]', space=smem, size = 0x4, offset = 0x4, fixed_abs, tag = 'smem constant byte address 0x4 - core index']
  #allocation1 [shape = 'u32[144,128]{1,0:T(1,128)}', space=vmem, size = 0x12000, scoped, tag = 'internal scratch']
  #allocation2 [shape = 'f32[4,8,128]{2,1,0:T(8,128)}', space=vmem, size = 0x4000, scoped, tag = 'scratch operand']
  #allocation3 [shape = 'f32[4,8,128]{2,1,0:T(8,128)}', space=vmem, size = 0x4000, scoped, tag = 'scratch operand']
  #allocation4 [shape = 'f32[4,8,128]{2,1,0:T(8,128)}', space=vmem, size = 0x4000, scoped, tag = 'scratch operand']
  #allocation5 [shape = 'f32[8,128]{1,0:T(8,128)}', space=vmem, size = 0x1000, scoped, tag = 'scratch operand']
  %s0 = inlined_call_operand.hbm [shape: f32[8,8,128], index: 0, kind: input, shape index: {}]
  %s1 = inlined_call_operand.hbm [shape: f32[8,128], index: 1, kind: input, shape index: {}]
  %s2 = inlined_call_operand.hbm [shape: f32[128,256], index: 2, kind: input, shape index: {}]
  %s3 = inlined_call_operand.vmem [shape: f32[1,256], index: 3, kind: input, shape index: {}]
  %s4 = inlined_call_operand.hbm [shape: f32[128,128], index: 4, kind: input, shape index: {}]
  %s5 = inlined_call_operand.hbm [shape: f32[128,128], index: 5, kind: input, shape index: {}]
  %s6 = inlined_call_operand.hbm [shape: f32[128,128], index: 6, kind: input, shape index: {}]
  %s7 = inlined_call_operand.hbm [shape: f32[128,128], index: 7, kind: input, shape index: {}]
  %s8 = inlined_call_operand.vmem [shape: f32[1,128], index: 8, kind: input, shape index: {}]
  %s9 = inlined_call_operand.hbm [shape: f32[8,8,128], index: 9, kind: output, shape index: {0}]
  %s10 = inlined_call_operand.hbm [shape: f32[8,128], index: 10, kind: output, shape index: {1}]
  %11 = xla_tuple %s9, %s10
  %s12 = sld [smem:[#allocation0]]
  $region109: #{tpu_custom_call.1} parent=0
    _
  %s14 = ssub.s32 1, %s12
  %s15 = scalar_select 0, %s14, %s12
  $region1: #{tpu_custom_call.1} parent=0
    #allocation6 [shape = 'u8[32768]{0}', space=vmem, size = 0x8000, scoped, tag = 'input window, operand 0']
    #allocation7 [shape = 's32[2]{0}', space=sflag, size = 0x8, scoped, tag = 'scoped memory for tpu_custom_call.1']
    #allocation8 [shape = 's32[2]{0}', space=sflag, size = 0x8, scoped, tag = 'scoped memory for tpu_custom_call.1']
    #allocation9 [shape = 'u8[4096]{0}', space=vmem, size = 0x1000, scoped, tag = 'input window, operand 1, single buffered']
    #allocation10 [shape = 's32[1]{0}', space=sflag, size = 0x4, scoped, tag = 'scoped memory for tpu_custom_call.1']
    #allocation11 [shape = 'u8[131072]{0}', space=vmem, size = 0x20000, scoped, tag = 'input window, operand 2, single buffered']
    #allocation12 [shape = 'u8[65536]{0}', space=vmem, size = 0x10000, scoped, tag = 'input window, operand 4, single buffered']
    #allocation13 [shape = 's32[1]{0}', space=sflag, size = 0x4, scoped, tag = 'scoped memory for tpu_custom_call.1']
    #allocation14 [shape = 'u8[65536]{0}', space=vmem, size = 0x10000, scoped, tag = 'input window, operand 5, single buffered']
    #allocation15 [shape = 'u8[65536]{0}', space=vmem, size = 0x10000, scoped, tag = 'input window, operand 6, single buffered']
    #allocation16 [shape = 's32[1]{0}', space=sflag, size = 0x4, scoped, tag = 'scoped memory for tpu_custom_call.1']
    #allocation17 [shape = 'u8[65536]{0}', space=vmem, size = 0x10000, scoped, tag = 'input window, operand 7, single buffered']
    #allocation18 [shape = 'u8[32768]{0}', space=vmem, size = 0x8000, scoped, tag = 'output window, operand 0']
    #allocation19 [shape = 'u8[4096]{0}', space=vmem, size = 0x1000, scoped, tag = 'output window, operand 1, single buffered']
    #allocation20 [shape = 's32[1]{0}', space=sflag, size = 0x4, scoped, tag = 'scoped memory for tpu_custom_call.1']
    %16 = vsyncpa [#allocation7], 0
    %s17 = scalar_lea.sflag [#allocation7], 1
    %18 = vsyncpa %s17, 0
    %19 = vsyncpa [#allocation10], 0
    %20 = vsyncpa [#allocation13], 0
    %21 = vsyncpa [#allocation16], 0
    %22 = vsyncpa [#allocation8], 0
    %s23 = scalar_lea.sflag [#allocation8], 1
    %24 = vsyncpa %s23, 0
    %25 = vsyncpa [#allocation20], 0
    loop: start=0, step=1, limit=4
    $region2: #{tpu_custom_call.1} parent=1 // loop_pre_header
      _
    $region3: #{tpu_custom_call.1} parent=1 // loop_header
      %s27 = sphi 0, %s31
      %p28 = scmp.ge.s32.totalorder %s27, 4
      %s34 = sphi 0, %s46
      %s35 = sphi 0, %s42
      %s36 = sphi 0, %s34
      %s37 = sphi 0, %s35
      %s38 = sphi 0, %s36
      %s39 = sphi 0, %s37
      %s51 = sphi 0, %s53
      %s54 = sphi 0, %s51
      %s55 = sphi 0, %s54
      %s71 = sphi 0, %s55
      %s77 = sphi 0, %s79
      %s80 = sphi 0, %s77
      %s81 = sphi 0, %s80
      %s97 = sphi 0, %s81
      %s101 = sphi 0, %s101
      %s103 = sphi 0, %s101
      %s104 = sphi 0, %s103
      %s118 = sphi 0, %s104
      %s122 = sphi 0, %s122
      %s124 = sphi 0, %s122
      %s125 = sphi 0, %s124
      %s139 = sphi 0, %s125
      %s143 = sphi 0, %s143
      %s145 = sphi 0, %s143
      %s146 = sphi 0, %s145
      %s160 = sphi 0, %s146
      %s164 = sphi 0, %s164
      %s166 = sphi 0, %s164
      %s167 = sphi 0, %s166
      %s181 = sphi 0, %s167
      %s185 = sphi 0, %s185
      %s187 = sphi 0, %s185
      %s188 = sphi 0, %s187
      %s202 = sphi 0, %s188
      %s206 = sphi 0, %s206
      %s208 = sphi 0, %s206
      %s209 = sphi 0, %s208
      %s223 = sphi 0, %s209
      %s227 = sphi 0, %s227
      %s229 = sphi 0, %s227
      %s230 = sphi 0, %s229
      %s244 = sphi 0, %s230
      %s252 = sphi 0, %s254
      %s255 = sphi 0, %s252
      %s256 = sphi 0, %s255
      %s272 = sphi 0, %s256
      %s278 = sphi 0, %s280
      %s281 = sphi 0, %s278
      %s282 = sphi 0, %s281
      %s298 = sphi 0, %s282
    $region4: #{tpu_custom_call.1} parent=1 // loop_header_branch
      %30 = sbr.rel (%p28) target = $region8
    $region5: #{tpu_custom_call.1} parent=1 // loop_body
      %s32 = ssub.s32 %s27, 1
      %s33 = ssub.s32 %s27, 2
      %s40 = sadd.s32 1, %s35
      %p41 = scmp.ge.s32.totalorder %s40, 2
      %s42 = scalar_select %p41, 0, %s40
      %s43 = sadd.s32 1, %s34
      %s44 = scalar_select %p41, %s43, %s34
      %p45 = scmp.ge.s32.totalorder %s44, 1
      %s46 = scalar_select %p45, 0, %s44
      %s47 = ssub.s32 %s35, %s42
      %s48 = ssub.s32 %s34, %s46
      %s49 = sor.u32 %s47, %s48
      %p50 = scmp.eq.s32.totalorder %s49, 0
      %s52 = sadd.s32 %s51, 1
      %s53 = scalar_select %p50, %s51, %s52
      %p56 = pneg %p50
      %p57 = scmp.eq.s32.totalorder %s27, 1
      %p58 = por %p56, %p57
      %p59 = scmp.ne.s32.totalorder %s51, %s54
      %p60 = scmp.eq.s32.totalorder %s27, 0
      %p61 = por %p59, %p60
      %p62 = scmp.ne.s32.totalorder %s51, %s54
      %p63 = scmp.eq.s32.totalorder %s32, 1
      %p64 = por %p62, %p63
      %p65 = scmp.ne.s32.totalorder %s54, %s55
      %p66 = scmp.eq.s32.totalorder %s32, 0
      %p67 = por %p65, %p66
      %p68 = scmp.ne.s32.totalorder %s54, %s55
      %p69 = scmp.eq.s32.totalorder %s33, 1
      %p70 = por %p68, %p69
      %p72 = scmp.ne.s32.totalorder %s55, %s71
      %p73 = scmp.eq.s32.totalorder %s33, 0
      %p74 = por %p72, %p73
      %s75 = ssub.s32 %s34, %s46
      %p76 = scmp.eq.s32.totalorder %s75, 0
      %s78 = sadd.s32 %s77, 1
      %s79 = scalar_select %p76, %s77, %s78
      %p82 = pneg %p76
      %p83 = scmp.eq.s32.totalorder %s27, 1
      %p84 = por %p82, %p83
      %p85 = scmp.ne.s32.totalorder %s77, %s80
      %p86 = scmp.eq.s32.totalorder %s27, 0
      %p87 = por %p85, %p86
      %p88 = scmp.ne.s32.totalorder %s77, %s80
      %p89 = scmp.eq.s32.totalorder %s32, 1
      %p90 = por %p88, %p89
      %p91 = scmp.ne.s32.totalorder %s80, %s81
      %p92 = scmp.eq.s32.totalorder %s32, 0
      %p93 = por %p91, %p92
      %p94 = scmp.ne.s32.totalorder %s80, %s81
      %p95 = scmp.eq.s32.totalorder %s33, 1
      %p96 = por %p94, %p95
      %p98 = scmp.ne.s32.totalorder %s81, %s97
      %p99 = scmp.eq.s32.totalorder %s33, 0
      %p100 = por %p98, %p99
      %s102 = sadd.s32 %s101, 1
      %p105 = scmp.eq.s32.totalorder %s27, 1
      %p106 = scmp.ne.s32.totalorder %s101, %s103
      %p107 = scmp.eq.s32.totalorder %s27, 0
      %p108 = por %p106, %p107
      %p109 = scmp.ne.s32.totalorder %s101, %s103
      %p110 = scmp.eq.s32.totalorder %s32, 1
      %p111 = por %p109, %p110
      %p112 = scmp.ne.s32.totalorder %s103, %s104
      %p113 = scmp.eq.s32.totalorder %s32, 0
      %p114 = por %p112, %p113
      %p115 = scmp.ne.s32.totalorder %s103, %s104
      %p116 = scmp.eq.s32.totalorder %s33, 1
      %p117 = por %p115, %p116
      %p119 = scmp.ne.s32.totalorder %s104, %s118
      %p120 = scmp.eq.s32.totalorder %s33, 0
      %p121 = por %p119, %p120
      %s123 = sadd.s32 %s122, 1
      %p126 = scmp.eq.s32.totalorder %s27, 1
      %p127 = scmp.ne.s32.totalorder %s122, %s124
      %p128 = scmp.eq.s32.totalorder %s27, 0
      %p129 = por %p127, %p128
      %p130 = scmp.ne.s32.totalorder %s122, %s124
      %p131 = scmp.eq.s32.totalorder %s32, 1
      %p132 = por %p130, %p131
      %p133 = scmp.ne.s32.totalorder %s124, %s125
      %p134 = scmp.eq.s32.totalorder %s32, 0
      %p135 = por %p133, %p134
      %p136 = scmp.ne.s32.totalorder %s124, %s125
      %p137 = scmp.eq.s32.totalorder %s33, 1
      %p138 = por %p136, %p137
      %p140 = scmp.ne.s32.totalorder %s125, %s139
      %p141 = scmp.eq.s32.totalorder %s33, 0
      %p142 = por %p140, %p141
      %s144 = sadd.s32 %s143, 1
      %p147 = scmp.eq.s32.totalorder %s27, 1
      %p148 = scmp.ne.s32.totalorder %s143, %s145
      %p149 = scmp.eq.s32.totalorder %s27, 0
      %p150 = por %p148, %p149
      %p151 = scmp.ne.s32.totalorder %s143, %s145
      %p152 = scmp.eq.s32.totalorder %s32, 1
      %p153 = por %p151, %p152
      %p154 = scmp.ne.s32.totalorder %s145, %s146
      %p155 = scmp.eq.s32.totalorder %s32, 0
      %p156 = por %p154, %p155
      %p157 = scmp.ne.s32.totalorder %s145, %s146
      %p158 = scmp.eq.s32.totalorder %s33, 1
      %p159 = por %p157, %p158
      %p161 = scmp.ne.s32.totalorder %s146, %s160
      %p162 = scmp.eq.s32.totalorder %s33, 0
      %p163 = por %p161, %p162
      %s165 = sadd.s32 %s164, 1
      %p168 = scmp.eq.s32.totalorder %s27, 1
      %p169 = scmp.ne.s32.totalorder %s164, %s166
      %p170 = scmp.eq.s32.totalorder %s27, 0
      %p171 = por %p169, %p170
      %p172 = scmp.ne.s32.totalorder %s164, %s166
      %p173 = scmp.eq.s32.totalorder %s32, 1
      %p174 = por %p172, %p173
      %p175 = scmp.ne.s32.totalorder %s166, %s167
      %p176 = scmp.eq.s32.totalorder %s32, 0
      %p177 = por %p175, %p176
      %p178 = scmp.ne.s32.totalorder %s166, %s167
      %p179 = scmp.eq.s32.totalorder %s33, 1
      %p180 = por %p178, %p179
      %p182 = scmp.ne.s32.totalorder %s167, %s181
      %p183 = scmp.eq.s32.totalorder %s33, 0
      %p184 = por %p182, %p183
      %s186 = sadd.s32 %s185, 1
      %p189 = scmp.eq.s32.totalorder %s27, 1
      %p190 = scmp.ne.s32.totalorder %s185, %s187
      %p191 = scmp.eq.s32.totalorder %s27, 0
      %p192 = por %p190, %p191
      %p193 = scmp.ne.s32.totalorder %s185, %s187
      %p194 = scmp.eq.s32.totalorder %s32, 1
      %p195 = por %p193, %p194
      %p196 = scmp.ne.s32.totalorder %s187, %s188
      %p197 = scmp.eq.s32.totalorder %s32, 0
      %p198 = por %p196, %p197
      %p199 = scmp.ne.s32.totalorder %s187, %s188
      %p200 = scmp.eq.s32.totalorder %s33, 1
      %p201 = por %p199, %p200
      %p203 = scmp.ne.s32.totalorder %s188, %s202
      %p204 = scmp.eq.s32.totalorder %s33, 0
      %p205 = por %p203, %p204
      %s207 = sadd.s32 %s206, 1
      %p210 = scmp.eq.s32.totalorder %s27, 1
      %p211 = scmp.ne.s32.totalorder %s206, %s208
      %p212 = scmp.eq.s32.totalorder %s27, 0
      %p213 = por %p211, %p212
      %p214 = scmp.ne.s32.totalorder %s206, %s208
      %p215 = scmp.eq.s32.totalorder %s32, 1
      %p216 = por %p214, %p215
      %p217 = scmp.ne.s32.totalorder %s208, %s209
      %p218 = scmp.eq.s32.totalorder %s32, 0
      %p219 = por %p217, %p218
      %p220 = scmp.ne.s32.totalorder %s208, %s209
      %p221 = scmp.eq.s32.totalorder %s33, 1
      %p222 = por %p220, %p221
      %p224 = scmp.ne.s32.totalorder %s209, %s223
      %p225 = scmp.eq.s32.totalorder %s33, 0
      %p226 = por %p224, %p225
      %s228 = sadd.s32 %s227, 1
      %p231 = scmp.eq.s32.totalorder %s27, 1
      %p232 = scmp.ne.s32.totalorder %s227, %s229
      %p233 = scmp.eq.s32.totalorder %s27, 0
      %p234 = por %p232, %p233
      %p235 = scmp.ne.s32.totalorder %s227, %s229
      %p236 = scmp.eq.s32.totalorder %s32, 1
      %p237 = por %p235, %p236
      %p238 = scmp.ne.s32.totalorder %s229, %s230
      %p239 = scmp.eq.s32.totalorder %s32, 0
      %p240 = por %p238, %p239
      %p241 = scmp.ne.s32.totalorder %s229, %s230
      %p242 = scmp.eq.s32.totalorder %s33, 1
      %p243 = por %p241, %p242
      %p245 = scmp.ne.s32.totalorder %s230, %s244
      %p246 = scmp.eq.s32.totalorder %s33, 0
      %p247 = por %p245, %p246
      %s248 = ssub.s32 %s35, %s42
      %s249 = ssub.s32 %s34, %s46
      %s250 = sor.u32 %s248, %s249
      %p251 = scmp.eq.s32.totalorder %s250, 0
      %s253 = sadd.s32 %s252, 1
      %s254 = scalar_select %p251, %s252, %s253
      %p257 = pneg %p251
      %p258 = scmp.eq.s32.totalorder %s27, 1
      %p259 = por %p257, %p258
      %p260 = scmp.ne.s32.totalorder %s252, %s255
      %p261 = scmp.eq.s32.totalorder %s27, 0
      %p262 = por %p260, %p261
      %p263 = scmp.ne.s32.totalorder %s252, %s255
      %p264 = scmp.eq.s32.totalorder %s32, 1
      %p265 = por %p263, %p264
      %p266 = scmp.ne.s32.totalorder %s255, %s256
      %p267 = scmp.eq.s32.totalorder %s32, 0
      %p268 = por %p266, %p267
      %p269 = scmp.ne.s32.totalorder %s255, %s256
      %p270 = scmp.eq.s32.totalorder %s33, 1
      %p271 = por %p269, %p270
      %p273 = scmp.ne.s32.totalorder %s256, %s272
      %p274 = scmp.eq.s32.totalorder %s33, 0
      %p275 = por %p273, %p274
      %s276 = ssub.s32 %s34, %s46
      %p277 = scmp.eq.s32.totalorder %s276, 0
      %s279 = sadd.s32 %s278, 1
      %s280 = scalar_select %p277, %s278, %s279
      %p283 = pneg %p277
      %p284 = scmp.eq.s32.totalorder %s27, 1
      %p285 = por %p283, %p284
      %p286 = scmp.ne.s32.totalorder %s278, %s281
      %p287 = scmp.eq.s32.totalorder %s27, 0
      %p288 = por %p286, %p287
      %p289 = scmp.ne.s32.totalorder %s278, %s281
      %p290 = scmp.eq.s32.totalorder %s32, 1
      %p291 = por %p289, %p290
      %p292 = scmp.ne.s32.totalorder %s281, %s282
      %p293 = scmp.eq.s32.totalorder %s32, 0
      %p294 = por %p292, %p293
      %p295 = scmp.ne.s32.totalorder %s281, %s282
      %p296 = scmp.eq.s32.totalorder %s33, 1
      %p297 = por %p295, %p296
      %p299 = scmp.ne.s32.totalorder %s282, %s298
      %p300 = scmp.eq.s32.totalorder %s33, 0
      %p301 = por %p299, %p300
      %p302 = scmp.le.s32.totalorder 1, %s27
      %p303 = scmp.lt.s32.totalorder %s27, 3
      %p304 = pnand %p302, %p303
      %p305 = pneg %p304
      // Predicated region
      $region9: #{tpu_custom_call.1} parent=5 // pred_check
        _
      $region10: #{tpu_custom_call.1} parent=5 // pred_check_branch
        %307 = sbr.rel (%p304) target = $region12
      $region11: #{tpu_custom_call.1} parent=5 // pred_region
        %s308 = ssub.s32 %s27, 1
        // Predicated region
        $region13: #{tpu_custom_call.1} parent=11 // pred_check
          %p309 = pneg %p93
        $region14: #{tpu_custom_call.1} parent=11 // pred_check_branch
          %311 = sbr.rel (%p309) target = $region16
        $region15: #{tpu_custom_call.1} parent=11 // pred_region
          %s313 = ssub.s32 128, 128
          %314 = vsyncadd [#allocation10], %s313
          %s315 = smul.addr %s36, 128
          %s316 = scalar_lea.hbm %s1, %s315
          %s318 = sshll.u32 [#allocation9], 4
          %s319 = int_to_ptr.vmem [resolvable:$true] %s318
          %321 = dma.hbm_to_vmem [thread:$0]  %s316, 128, %s319, [#allocation10]
        $region16: #{tpu_custom_call.1} parent=11 // pred_fallthru
          _
        // Predicated region
        $region17: #{tpu_custom_call.1} parent=11 // pred_check
          %p322 = pneg %p114
        $region18: #{tpu_custom_call.1} parent=11 // pred_check_branch
          %324 = sbr.rel (%p322) target = $region20
        $region19: #{tpu_custom_call.1} parent=11 // pred_region
          %s326 = ssub.s32 4096, 4096
          %327 = vsyncadd [#allocation10], %s326
          %s328 = sshll.u32 [#allocation11], 4
          %s329 = int_to_ptr.vmem [resolvable:$true] %s328
          %334 = dma.hbm_to_vmem [thread:$0]  %s2, 4096, %s329, [#allocation10], 256, 256, 16
        $region20: #{tpu_custom_call.1} parent=11 // pred_fallthru
          _
        // Predicated region
        $region21: #{tpu_custom_call.1} parent=11 // pred_check
          %p335 = pneg %p135
        $region22: #{tpu_custom_call.1} parent=11 // pred_check_branch
          %337 = sbr.rel (%p335) target = $region24
        $region23: #{tpu_custom_call.1} parent=11 // pred_region
          _
        $region24: #{tpu_custom_call.1} parent=11 // pred_fallthru
          _
        // Predicated region
        $region25: #{tpu_custom_call.1} parent=11 // pred_check
          %p338 = pneg %p156
        $region26: #{tpu_custom_call.1} parent=11 // pred_check_branch
          %340 = sbr.rel (%p338) target = $region28
        $region27: #{tpu_custom_call.1} parent=11 // pred_region
          %s342 = ssub.s32 2048, 2048
          %343 = vsyncadd [#allocation13], %s342
          %s344 = sshll.u32 [#allocation12], 4
          %s345 = int_to_ptr.vmem [resolvable:$true] %s344
          %350 = dma.hbm_to_vmem [thread:$0]  %s4, 2048, %s345, [#allocation13], 128, 128, 8
        $region28: #{tpu_custom_call.1} parent=11 // pred_fallthru
          _
        // Predicated region
        $region29: #{tpu_custom_call.1} parent=11 // pred_check
          %p351 = pneg %p177
        $region30: #{tpu_custom_call.1} parent=11 // pred_check_branch
          %353 = sbr.rel (%p351) target = $region32
        $region31: #{tpu_custom_call.1} parent=11 // pred_region
          %s355 = ssub.s32 2048, 2048
          %356 = vsyncadd [#allocation13], %s355
          %s357 = sshll.u32 [#allocation14], 4
          %s358 = int_to_ptr.vmem [resolvable:$true] %s357
          %363 = dma.hbm_to_vmem [thread:$0]  %s5, 2048, %s358, [#allocation13], 128, 128, 8
        $region32: #{tpu_custom_call.1} parent=11 // pred_fallthru
          _
        // Predicated region
        $region33: #{tpu_custom_call.1} parent=11 // pred_check
          %p364 = pneg %p198
        $region34: #{tpu_custom_call.1} parent=11 // pred_check_branch
          %366 = sbr.rel (%p364) target = $region36
        $region35: #{tpu_custom_call.1} parent=11 // pred_region
          %s368 = ssub.s32 2048, 2048
          %369 = vsyncadd [#allocation16], %s368
          %s370 = sshll.u32 [#allocation15], 4
          %s371 = int_to_ptr.vmem [resolvable:$true] %s370
          %376 = dma.hbm_to_vmem [thread:$0]  %s6, 2048, %s371, [#allocation16], 128, 128, 8
        $region36: #{tpu_custom_call.1} parent=11 // pred_fallthru
          _
        // Predicated region
        $region37: #{tpu_custom_call.1} parent=11 // pred_check
          %p377 = pneg %p219
        $region38: #{tpu_custom_call.1} parent=11 // pred_check_branch
          %379 = sbr.rel (%p377) target = $region40
        $region39: #{tpu_custom_call.1} parent=11 // pred_region
          %s381 = ssub.s32 2048, 2048
          %382 = vsyncadd [#allocation16], %s381
          %s383 = sshll.u32 [#allocation17], 4
          %s384 = int_to_ptr.vmem [resolvable:$true] %s383
          %389 = dma.hbm_to_vmem [thread:$0]  %s7, 2048, %s384, [#allocation16], 128, 128, 8
        $region40: #{tpu_custom_call.1} parent=11 // pred_fallthru
          _
        // Predicated region
        $region41: #{tpu_custom_call.1} parent=11 // pred_check
          %p390 = pneg %p240
        $region42: #{tpu_custom_call.1} parent=11 // pred_check_branch
          %392 = sbr.rel (%p390) target = $region44
        $region43: #{tpu_custom_call.1} parent=11 // pred_region
          _
        $region44: #{tpu_custom_call.1} parent=11 // pred_fallthru
          _
      $region12: #{tpu_custom_call.1} parent=5 // pred_fallthru
        _
      %p393 = scmp.lt.s32.totalorder %s27, 2
      // Predicated region
      $region45: #{tpu_custom_call.1} parent=5 // pred_check
        %p394 = pneg %p393
      $region46: #{tpu_custom_call.1} parent=5 // pred_check_branch
        %396 = sbr.rel (%p394) target = $region48
      $region47: #{tpu_custom_call.1} parent=5 // pred_region
        // Predicated region
        $region49: #{tpu_custom_call.1} parent=47 // pred_check
          %p397 = pneg %p61
        $region50: #{tpu_custom_call.1} parent=47 // pred_check_branch
          %399 = sbr.rel (%p397) target = $region52
        $region51: #{tpu_custom_call.1} parent=47 // pred_region
          %s400 = sand.u32 %s51, 1
          %s401 = scalar_lea.sflag [#allocation7], %s400
          %s402 = sand.u32 %s51, 1
          %s403 = smul.addr %s402, 32
          %s404 = scalar_lea.vmem [#allocation6], %s403
          %s405 = smul.u32 4, %s35
          %s407 = ssub.s32 512, 512
          %408 = vsyncadd %s401, %s407
          %s409 = sadd.s32 %s34, %s405
          %s410 = smul.addr %s409, 128
          %s411 = scalar_lea.hbm %s0, %s410
          %s412 = sshll.u32 %s404, 4
          %s413 = int_to_ptr.vmem [resolvable:$true] %s412
          %418 = dma.hbm_to_vmem [thread:$0]  %s411, 512, %s413, %s401, 128, 128, 8
        $region52: #{tpu_custom_call.1} parent=47 // pred_fallthru
          _
      $region48: #{tpu_custom_call.1} parent=5 // pred_fallthru
        _
      %p419 = scmp.le.s32.totalorder 1, %s27
      %p420 = scmp.lt.s32.totalorder %s27, 3
      %p421 = pnand %p419, %p420
      %p422 = pneg %p421
      // Predicated region
      $region53: #{tpu_custom_call.1} parent=5 // pred_check
        _
      $region54: #{tpu_custom_call.1} parent=5 // pred_check_branch
        %424 = sbr.rel (%p421) target = $region56
      $region55: #{tpu_custom_call.1} parent=5 // pred_region
        %s425 = ssub.s32 %s27, 1
        %s426 = sand.u32 %s54, 1
        %s427 = scalar_lea.sflag [#allocation7], %s426
        %s428 = sand.u32 %s54, 1
        %s429 = smul.addr %s428, 32
        %s430 = scalar_lea.vmem [#allocation6], %s429
        // Predicated region
        $region57: #{tpu_custom_call.1} parent=55 // pred_check
          %p431 = pneg %p67
        $region58: #{tpu_custom_call.1} parent=55 // pred_check_branch
          %433 = sbr.rel (%p431) target = $region60
        $region59: #{tpu_custom_call.1} parent=55 // pred_region
          %434 = dma.done %s427, 512
        $region60: #{tpu_custom_call.1} parent=55 // pred_fallthru
          _
        // Predicated region
        $region61: #{tpu_custom_call.1} parent=55 // pred_check
          %p435 = pneg %p93
        $region62: #{tpu_custom_call.1} parent=55 // pred_check_branch
          %437 = sbr.rel (%p435) target = $region64
        $region63: #{tpu_custom_call.1} parent=55 // pred_region
          %438 = dma.done [#allocation10], 128
        $region64: #{tpu_custom_call.1} parent=55 // pred_fallthru
          _
        // Predicated region
        $region65: #{tpu_custom_call.1} parent=55 // pred_check
          %p439 = pneg %p114
        $region66: #{tpu_custom_call.1} parent=55 // pred_check_branch
          %441 = sbr.rel (%p439) target = $region68
        $region67: #{tpu_custom_call.1} parent=55 // pred_region
          %442 = dma.done [#allocation10], 4096
        $region68: #{tpu_custom_call.1} parent=55 // pred_fallthru
          _
        // Predicated region
        $region69: #{tpu_custom_call.1} parent=55 // pred_check
          %p443 = pneg %p156
        $region70: #{tpu_custom_call.1} parent=55 // pred_check_branch
          %445 = sbr.rel (%p443) target = $region72
        $region71: #{tpu_custom_call.1} parent=55 // pred_region
          %446 = dma.done [#allocation13], 2048
        $region72: #{tpu_custom_call.1} parent=55 // pred_fallthru
          _
        // Predicated region
        $region73: #{tpu_custom_call.1} parent=55 // pred_check
          %p447 = pneg %p177
        $region74: #{tpu_custom_call.1} parent=55 // pred_check_branch
          %449 = sbr.rel (%p447) target = $region76
        $region75: #{tpu_custom_call.1} parent=55 // pred_region
          %450 = dma.done [#allocation13], 2048
        $region76: #{tpu_custom_call.1} parent=55 // pred_fallthru
          _
        // Predicated region
        $region77: #{tpu_custom_call.1} parent=55 // pred_check
          %p451 = pneg %p198
        $region78: #{tpu_custom_call.1} parent=55 // pred_check_branch
          %453 = sbr.rel (%p451) target = $region80
        $region79: #{tpu_custom_call.1} parent=55 // pred_region
          %454 = dma.done [#allocation16], 2048
        $region80: #{tpu_custom_call.1} parent=55 // pred_fallthru
          _
        // Predicated region
        $region81: #{tpu_custom_call.1} parent=55 // pred_check
          %p455 = pneg %p219
        $region82: #{tpu_custom_call.1} parent=55 // pred_check_branch
          %457 = sbr.rel (%p455) target = $region84
        $region83: #{tpu_custom_call.1} parent=55 // pred_region
          %458 = dma.done [#allocation16], 2048
        $region84: #{tpu_custom_call.1} parent=55 // pred_fallthru
          _
        %s459 = sand.u32 %s54, 1
        %s460 = scalar_lea.sflag [#allocation7], %s459
        %s461 = sand.u32 %s54, 1
        %s462 = smul.addr %s461, 32
        %s463 = scalar_lea.vmem [#allocation6], %s462
        %p464 = pneg %p67
        %p465 = pneg %p64
        %p466 = pneg %p93
        %p467 = pneg %p90
        %p468 = pneg %p114
        %p469 = pneg %p111
        %p470 = pneg %p135
        %p471 = pneg %p132
        %p472 = pneg %p156
        %p473 = pneg %p153
        %p474 = pneg %p177
        %p475 = pneg %p174
        %p476 = pneg %p198
        %p477 = pneg %p195
        %p478 = pneg %p219
        %p479 = pneg %p216
        %p480 = pneg %p240
        %p481 = pneg %p237
        %p482 = pneg %p268
        %p483 = pneg %p265
        %s484 = sand.u32 %s255, 1
        %s485 = scalar_lea.sflag [#allocation8], %s484
        %s486 = sand.u32 %s255, 1
        %s487 = smul.addr %s486, 32
        %s488 = scalar_lea.vmem [#allocation18], %s487
        %p489 = pneg %p294
        %p490 = pneg %p291
        %s491 = smul.u32 4, %s37
        %s492 = smul.u32 4, %s37
        %p493 = scmp.eq.s32.totalorder %s37, 0
        // Predicated region
        $region85: #{tpu_custom_call.1} parent=55 // pred_check
          %p494 = pneg %p493
        $region86: #{tpu_custom_call.1} parent=55 // pred_check_branch
          %496 = sbr.rel (%p494) target = $region88
        $region87: #{tpu_custom_call.1} parent=55 // pred_region
          %v497 = vld [vmem:[#allocation9] sm:$0xff]
          %498 = vst [vmem:[#allocation5] sm:$0xff] %v497
        $region88: #{tpu_custom_call.1} parent=55 // pred_fallthru
          _
        %v499 = vld [vmem:[%s430] sm:$0xff]
        %v500 = vld [vmem:[%s430 + $0x8] sm:$0xff]
        %v501 = vld [vmem:[%s430 + $0x10] sm:$0xff]
        %v502 = vld [vmem:[%s430 + $0x18] sm:$0xff]
        %v503 = vld [vmem:[#allocation11] sm:$0xff]
        %v504 = vld [vmem:[#allocation11 + $0x8] sm:$0xff]
        %v505 = vld [vmem:[#allocation11 + $0x10] sm:$0xff]
        %v506 = vld [vmem:[#allocation11 + $0x18] sm:$0xff]
        %v507 = vld [vmem:[#allocation11 + $0x20] sm:$0xff]
        %v508 = vld [vmem:[#allocation11 + $0x28] sm:$0xff]
        %v509 = vld [vmem:[#allocation11 + $0x30] sm:$0xff]
        %v510 = vld [vmem:[#allocation11 + $0x38] sm:$0xff]
        %v511 = vld [vmem:[#allocation11 + $0x40] sm:$0xff]
        %v512 = vld [vmem:[#allocation11 + $0x48] sm:$0xff]
        %v513 = vld [vmem:[#allocation11 + $0x50] sm:$0xff]
        %v514 = vld [vmem:[#allocation11 + $0x58] sm:$0xff]
        %v515 = vld [vmem:[#allocation11 + $0x60] sm:$0xff]
        %v516 = vld [vmem:[#allocation11 + $0x68] sm:$0xff]
        %v517 = vld [vmem:[#allocation11 + $0x70] sm:$0xff]
        %v518 = vld [vmem:[#allocation11 + $0x78] sm:$0xff]
        %v519 = vld [vmem:[#allocation11 + $0x80] sm:$0xff]
        %v520 = vld [vmem:[#allocation11 + $0x88] sm:$0xff]
        %v521 = vld [vmem:[#allocation11 + $0x90] sm:$0xff]
        %v522 = vld [vmem:[#allocation11 + $0x98] sm:$0xff]
        %v523 = vld [vmem:[#allocation11 + $0xa0] sm:$0xff]
        %v524 = vld [vmem:[#allocation11 + $0xa8] sm:$0xff]
        %v525 = vld [vmem:[#allocation11 + $0xb0] sm:$0xff]
        %v526 = vld [vmem:[#allocation11 + $0xb8] sm:$0xff]
        %v527 = vld [vmem:[#allocation11 + $0xc0] sm:$0xff]
        %v528 = vld [vmem:[#allocation11 + $0xc8] sm:$0xff]
        %v529 = vld [vmem:[#allocation11 + $0xd0] sm:$0xff]
        %v530 = vld [vmem:[#allocation11 + $0xd8] sm:$0xff]
        %v531 = vld [vmem:[#allocation11 + $0xe0] sm:$0xff]
        %v532 = vld [vmem:[#allocation11 + $0xe8] sm:$0xff]
        %v533 = vld [vmem:[#allocation11 + $0xf0] sm:$0xff]
        %v534 = vld [vmem:[#allocation11 + $0xf8] sm:$0xff]
        %v535 = vld [vmem:[%s3] sm:$0x3]
        %v537 = vlaneseq
        %v538 = vshrl.u32 %v537, 7
        %v539 = vsub.s32 0, %v538
        %v540 = vrot.slane %v535, %v539
        %v541 = vlaneseq
        %v542 = vshrl.u32 %v541, 7
        %v543 = vsub.s32 1, %v542
        %v544 = vrot.slane %v535, %v543
        %547 = vmatprep.subr.mxu0 %v534
        %548 = vmatpush1.msra.mxu0 %v533
        %549 = vmatprep.subr.mxu0 %v532
        %550 = vmatpush1.msra.mxu0 %v531
        %551 = vmatprep.subr.mxu0 %v530
        %552 = vmatpush1.msra.mxu0 %v529
        %553 = vmatprep.subr.mxu0 %v528
        %554 = vmatpush1.msra.mxu0 %v527
        %555 = vmatprep.subr.mxu0 %v526
        %556 = vmatpush1.msra.mxu0 %v525
        %557 = vmatprep.subr.mxu0 %v524
        %558 = vmatpush1.msra.mxu0 %v523
        %559 = vmatprep.subr.mxu0 %v522
        %560 = vmatpush1.msra.mxu0 %v521
        %561 = vmatprep.subr.mxu0 %v520
        %562 = vmatpush1.msra.mxu0 %v519
        %563 = vmatprep.subr.mxu0 %v518
        %564 = vmatpush1.msra.mxu0 %v517
        %565 = vmatprep.subr.mxu0 %v516
        %566 = vmatpush1.msra.mxu0 %v515
        %567 = vmatprep.subr.mxu0 %v514
        %568 = vmatpush1.msra.mxu0 %v513
        %569 = vmatprep.subr.mxu0 %v512
        %570 = vmatpush1.msra.mxu0 %v511
        %571 = vmatprep.subr.mxu0 %v510
        %572 = vmatpush1.msra.mxu0 %v509
        %573 = vmatprep.subr.mxu0 %v508
        %574 = vmatpush1.msra.mxu0 %v507
        %575 = vmatprep.subr.mxu0 %v506
        %576 = vmatpush1.msra.mxu0 %v505
        %577 = vmatprep.subr.mxu0 %v504
        %578 = vmatpush1.msra.mxu0 %v503
        %579 = vmatprep.subr.mxu0 0.0
        %580 = vmatpush2.msra.mxu0 0.0
        %581 = vmatprep.subr.mxu0 0.0
        %582 = vmatpush2.msra.mxu0 0.0
        %583 = vmatprep.subr.mxu0 0.0
        %584 = vmatpush2.msra.mxu0 0.0
        %585 = vmatprep.subr.mxu0 0.0
        %586 = vmatpush2.msra.mxu0 0.0
        %587 = vmatprep.subr.mxu0 0.0
        %588 = vmatpush2.msra.mxu0 0.0
        %589 = vmatprep.subr.mxu0 0.0
        %590 = vmatpush2.msra.mxu0 0.0
        %591 = vmatprep.subr.mxu0 0.0
        %592 = vmatpush2.msra.mxu0 0.0
        %593 = vmatprep.subr.mxu0 0.0
        %594 = vmatpush2.msra.mxu0 0.0
        %595 = vmatprep.subr.mxu0 0.0
        %596 = vmatpush2.msra.mxu0 0.0
        %597 = vmatprep.subr.mxu0 0.0
        %598 = vmatpush2.msra.mxu0 0.0
        %599 = vmatprep.subr.mxu0 0.0
        %600 = vmatpush2.msra.mxu0 0.0
        %601 = vmatprep.subr.mxu0 0.0
        %602 = vmatpush2.msra.mxu0 0.0
        %603 = vmatprep.subr.mxu0 0.0
        %604 = vmatpush2.msra.mxu0 0.0
        %605 = vmatprep.subr.mxu0 0.0
        %606 = vmatpush2.msra.mxu0 0.0
        %607 = vmatprep.subr.mxu0 0.0
        %608 = vmatpush2.msra.mxu0 0.0
        %609 = vmatprep.subr.mxu0 0.0
        %610 = vmatpush2.msra.mxu0 0.0
        %611 = vmatprep.mubr.f32.mxu0 0.0
        %612 = vmatmul.mubr.f32.gmra.mxu0 %v499
        %v613 = vpop.f32.mrf.mxu0
        %v614 = vadd.f32 %v540, %v613
        %v615 = vpop.f32.mrf.mxu0
        %v616 = vadd.f32 %v544, %v615
        %617 = vmatprep.mubr.f32.mxu0 0.0
        %618 = vmatmul.mubr.f32.gmra.mxu0 %v500
        %v619 = vpop.f32.mrf.mxu0
        %v620 = vadd.f32 %v540, %v619
        %v621 = vpop.f32.mrf.mxu0
        %v622 = vadd.f32 %v544, %v621
        %623 = vmatprep.mubr.f32.mxu0 0.0
        %624 = vmatmul.mubr.f32.gmra.mxu0 %v501
        %v625 = vpop.f32.mrf.mxu0
        %v626 = vadd.f32 %v540, %v625
        %v627 = vpop.f32.mrf.mxu0
        %v628 = vadd.f32 %v544, %v627
        %629 = vmatprep.mubr.f32.mxu0 0.0
        %630 = vmatmul.mubr.f32.gmra.mxu0 %v502
        %v631 = vpop.f32.mrf.mxu0
        %v632 = vadd.f32 %v540, %v631
        %v633 = vpop.f32.mrf.mxu0
        %v634 = vadd.f32 %v544, %v633
        %635 = vdwg.mxu0
        %636 = vst [vmem:[#allocation2] sm:$0xff] %v614
        %637 = vst [vmem:[#allocation2 + $0x8] sm:$0xff] %v620
        %638 = vst [vmem:[#allocation2 + $0x10] sm:$0xff] %v626
        %639 = vst [vmem:[#allocation2 + $0x18] sm:$0xff] %v632
        %v640 = vld [vmem:[#allocation5] sm:$0xff]
        %641 = vst [vmem:[#allocation3] sm:$0xff] %v640
        %v642 = vld [vmem:[#allocation2] sm:$0xff]
        %v643 = vld [vmem:[#allocation12] sm:$0xff]
        %v644 = vld [vmem:[#allocation12 + $0x8] sm:$0xff]
        %v645 = vld [vmem:[#allocation12 + $0x10] sm:$0xff]
        %v646 = vld [vmem:[#allocation12 + $0x18] sm:$0xff]
        %v647 = vld [vmem:[#allocation12 + $0x20] sm:$0xff]
        %v648 = vld [vmem:[#allocation12 + $0x28] sm:$0xff]
        %v649 = vld [vmem:[#allocation12 + $0x30] sm:$0xff]
        %v650 = vld [vmem:[#allocation12 + $0x38] sm:$0xff]
        %v651 = vld [vmem:[#allocation12 + $0x40] sm:$0xff]
        %v652 = vld [vmem:[#allocation12 + $0x48] sm:$0xff]
        %v653 = vld [vmem:[#allocation12 + $0x50] sm:$0xff]
        %v654 = vld [vmem:[#allocation12 + $0x58] sm:$0xff]
        %v655 = vld [vmem:[#allocation12 + $0x60] sm:$0xff]
        %v656 = vld [vmem:[#allocation12 + $0x68] sm:$0xff]
        %v657 = vld [vmem:[#allocation12 + $0x70] sm:$0xff]
        %v658 = vld [vmem:[#allocation12 + $0x78] sm:$0xff]
        %659 = vmatprep.subr.mxu0 0.0
        %660 = vmatpush1.msra.mxu0 %v658
        %661 = vmatprep.subr.mxu0 0.0
        %662 = vmatpush1.msra.mxu0 %v657
        %663 = vmatprep.subr.mxu0 0.0
        %664 = vmatpush1.msra.mxu0 %v656
        %665 = vmatprep.subr.mxu0 0.0
        %666 = vmatpush1.msra.mxu0 %v655
        %667 = vmatprep.subr.mxu0 0.0
        %668 = vmatpush1.msra.mxu0 %v654
        %669 = vmatprep.subr.mxu0 0.0
        %670 = vmatpush1.msra.mxu0 %v653
        %671 = vmatprep.subr.mxu0 0.0
        %672 = vmatpush1.msra.mxu0 %v652
        %673 = vmatprep.subr.mxu0 0.0
        %674 = vmatpush1.msra.mxu0 %v651
        %675 = vmatprep.subr.mxu0 0.0
        %676 = vmatpush1.msra.mxu0 %v650
        %677 = vmatprep.subr.mxu0 0.0
        %678 = vmatpush1.msra.mxu0 %v649
        %679 = vmatprep.subr.mxu0 0.0
        %680 = vmatpush1.msra.mxu0 %v648
        %681 = vmatprep.subr.mxu0 0.0
        %682 = vmatpush1.msra.mxu0 %v647
        %683 = vmatprep.subr.mxu0 0.0
        %684 = vmatpush1.msra.mxu0 %v646
        %685 = vmatprep.subr.mxu0 0.0
        %686 = vmatpush1.msra.mxu0 %v645
        %687 = vmatprep.subr.mxu0 0.0
        %688 = vmatpush1.msra.mxu0 %v644
        %689 = vmatprep.subr.mxu0 0.0
        %690 = vmatpush1.msra.mxu0 %v643
        %691 = vmatprep.subr.mxu0 0.0
        %692 = vmatpush2.msra.mxu0 0.0
        %693 = vmatprep.subr.mxu0 0.0
        %694 = vmatpush2.msra.mxu0 0.0
        %695 = vmatprep.subr.mxu0 0.0
        %696 = vmatpush2.msra.mxu0 0.0
        %697 = vmatprep.subr.mxu0 0.0
        %698 = vmatpush2.msra.mxu0 0.0
        %699 = vmatprep.subr.mxu0 0.0
        %700 = vmatpush2.msra.mxu0 0.0
        %701 = vmatprep.subr.mxu0 0.0
        %702 = vmatpush2.msra.mxu0 0.0
        %703 = vmatprep.subr.mxu0 0.0
        %704 = vmatpush2.msra.mxu0 0.0
        %705 = vmatprep.subr.mxu0 0.0
        %706 = vmatpush2.msra.mxu0 0.0
        %707 = vmatprep.subr.mxu0 0.0
        %708 = vmatpush2.msra.mxu0 0.0
        %709 = vmatprep.subr.mxu0 0.0
        %710 = vmatpush2.msra.mxu0 0.0
        %711 = vmatprep.subr.mxu0 0.0
        %712 = vmatpush2.msra.mxu0 0.0
        %713 = vmatprep.subr.mxu0 0.0
        %714 = vmatpush2.msra.mxu0 0.0
        %715 = vmatprep.subr.mxu0 0.0
        %716 = vmatpush2.msra.mxu0 0.0
        %717 = vmatprep.subr.mxu0 0.0
        %718 = vmatpush2.msra.mxu0 0.0
        %719 = vmatprep.subr.mxu0 0.0
        %720 = vmatpush2.msra.mxu0 0.0
        %721 = vmatprep.subr.mxu0 0.0
        %722 = vmatpush2.msra.mxu0 0.0
        %723 = vmatprep.mubr.f32.mxu0 0.0
        %724 = vmatmul.mubr.f32.gmra.mxu0 %v640
        %v725 = vpop.f32.mrf.mxu0
        %v726 = vadd.f32 0.0, %v725
        %v727 = vpop.f32.mrf.mxu0
        %728 = vdwg.mxu0
        %v729 = vadd.f32 %v642, %v726
        %730 = vst [vmem:[#allocation4] sm:$0xff] %v729
        %s731 = scalar_lea.vmem [#allocation3], 8
        %732 = vst [vmem:[%s731] sm:$0xff] %v729
        %s733 = scalar_lea.vmem [#allocation2], 8
        %v734 = vld [vmem:[%s733] sm:$0xff]
        %v735 = vld [vmem:[#allocation12] sm:$0xff]
        %v736 = vld [vmem:[#allocation12 + $0x8] sm:$0xff]
        %v737 = vld [vmem:[#allocation12 + $0x10] sm:$0xff]
        %v738 = vld [vmem:[#allocation12 + $0x18] sm:$0xff]
        %v739 = vld [vmem:[#allocation12 + $0x20] sm:$0xff]
        %v740 = vld [vmem:[#allocation12 + $0x28] sm:$0xff]
        %v741 = vld [vmem:[#allocation12 + $0x30] sm:$0xff]
        %v742 = vld [vmem:[#allocation12 + $0x38] sm:$0xff]
        %v743 = vld [vmem:[#allocation12 + $0x40] sm:$0xff]
        %v744 = vld [vmem:[#allocation12 + $0x48] sm:$0xff]
        %v745 = vld [vmem:[#allocation12 + $0x50] sm:$0xff]
        %v746 = vld [vmem:[#allocation12 + $0x58] sm:$0xff]
        %v747 = vld [vmem:[#allocation12 + $0x60] sm:$0xff]
        %v748 = vld [vmem:[#allocation12 + $0x68] sm:$0xff]
        %v749 = vld [vmem:[#allocation12 + $0x70] sm:$0xff]
        %v750 = vld [vmem:[#allocation12 + $0x78] sm:$0xff]
        %751 = vmatprep.subr.mxu0 0.0
        %752 = vmatpush1.msra.mxu0 %v750
        %753 = vmatprep.subr.mxu0 0.0
        %754 = vmatpush1.msra.mxu0 %v749
        %755 = vmatprep.subr.mxu0 0.0
        %756 = vmatpush1.msra.mxu0 %v748
        %757 = vmatprep.subr.mxu0 0.0
        %758 = vmatpush1.msra.mxu0 %v747
        %759 = vmatprep.subr.mxu0 0.0
        %760 = vmatpush1.msra.mxu0 %v746
        %761 = vmatprep.subr.mxu0 0.0
        %762 = vmatpush1.msra.mxu0 %v745
        %763 = vmatprep.subr.mxu0 0.0
        %764 = vmatpush1.msra.mxu0 %v744
        %765 = vmatprep.subr.mxu0 0.0
        %766 = vmatpush1.msra.mxu0 %v743
        %767 = vmatprep.subr.mxu0 0.0
        %768 = vmatpush1.msra.mxu0 %v742
        %769 = vmatprep.subr.mxu0 0.0
        %770 = vmatpush1.msra.mxu0 %v741
        %771 = vmatprep.subr.mxu0 0.0
        %772 = vmatpush1.msra.mxu0 %v740
        %773 = vmatprep.subr.mxu0 0.0
        %774 = vmatpush1.msra.mxu0 %v739
        %775 = vmatprep.subr.mxu0 0.0
        %776 = vmatpush1.msra.mxu0 %v738
        %777 = vmatprep.subr.mxu0 0.0
        %778 = vmatpush1.msra.mxu0 %v737
        %779 = vmatprep.subr.mxu0 0.0
        %780 = vmatpush1.msra.mxu0 %v736
        %781 = vmatprep.subr.mxu0 0.0
        %782 = vmatpush1.msra.mxu0 %v735
        %783 = vmatprep.subr.mxu0 0.0
        %784 = vmatpush2.msra.mxu0 0.0
        %785 = vmatprep.subr.mxu0 0.0
        %786 = vmatpush2.msra.mxu0 0.0
        %787 = vmatprep.subr.mxu0 0.0
        %788 = vmatpush2.msra.mxu0 0.0
        %789 = vmatprep.subr.mxu0 0.0
        %790 = vmatpush2.msra.mxu0 0.0
        %791 = vmatprep.subr.mxu0 0.0
        %792 = vmatpush2.msra.mxu0 0.0
        %793 = vmatprep.subr.mxu0 0.0
        %794 = vmatpush2.msra.mxu0 0.0
        %795 = vmatprep.subr.mxu0 0.0
        %796 = vmatpush2.msra.mxu0 0.0
        %797 = vmatprep.subr.mxu0 0.0
        %798 = vmatpush2.msra.mxu0 0.0
        %799 = vmatprep.subr.mxu0 0.0
        %800 = vmatpush2.msra.mxu0 0.0
        %801 = vmatprep.subr.mxu0 0.0
        %802 = vmatpush2.msra.mxu0 0.0
        %803 = vmatprep.subr.mxu0 0.0
        %804 = vmatpush2.msra.mxu0 0.0
        %805 = vmatprep.subr.mxu0 0.0
        %806 = vmatpush2.msra.mxu0 0.0
        %807 = vmatprep.subr.mxu0 0.0
        %808 = vmatpush2.msra.mxu0 0.0
        %809 = vmatprep.subr.mxu0 0.0
        %810 = vmatpush2.msra.mxu0 0.0
        %811 = vmatprep.subr.mxu0 0.0
        %812 = vmatpush2.msra.mxu0 0.0
        %813 = vmatprep.subr.mxu0 0.0
        %814 = vmatpush2.msra.mxu0 0.0
        %815 = vmatprep.mubr.f32.mxu0 0.0
        %816 = vmatmul.mubr.f32.gmra.mxu0 %v729
        %v817 = vpop.f32.mrf.mxu0
        %v818 = vadd.f32 0.0, %v817
        %v819 = vpop.f32.mrf.mxu0
        %820 = vdwg.mxu0
        %v821 = vadd.f32 %v734, %v818
        %s822 = scalar_lea.vmem [#allocation4], 8
        %823 = vst [vmem:[%s822] sm:$0xff] %v821
        %s824 = scalar_lea.vmem [#allocation3], 16
        %825 = vst [vmem:[%s824] sm:$0xff] %v821
        %s826 = scalar_lea.vmem [#allocation2], 16
        %v827 = vld [vmem:[%s826] sm:$0xff]
        %v828 = vld [vmem:[#allocation12] sm:$0xff]
        %v829 = vld [vmem:[#allocation12 + $0x8] sm:$0xff]
        %v830 = vld [vmem:[#allocation12 + $0x10] sm:$0xff]
        %v831 = vld [vmem:[#allocation12 + $0x18] sm:$0xff]
        %v832 = vld [vmem:[#allocation12 + $0x20] sm:$0xff]
        %v833 = vld [vmem:[#allocation12 + $0x28] sm:$0xff]
        %v834 = vld [vmem:[#allocation12 + $0x30] sm:$0xff]
        %v835 = vld [vmem:[#allocation12 + $0x38] sm:$0xff]
        %v836 = vld [vmem:[#allocation12 + $0x40] sm:$0xff]
        %v837 = vld [vmem:[#allocation12 + $0x48] sm:$0xff]
        %v838 = vld [vmem:[#allocation12 + $0x50] sm:$0xff]
        %v839 = vld [vmem:[#allocation12 + $0x58] sm:$0xff]
        %v840 = vld [vmem:[#allocation12 + $0x60] sm:$0xff]
        %v841 = vld [vmem:[#allocation12 + $0x68] sm:$0xff]
        %v842 = vld [vmem:[#allocation12 + $0x70] sm:$0xff]
        %v843 = vld [vmem:[#allocation12 + $0x78] sm:$0xff]
        %844 = vmatprep.subr.mxu0 0.0
        %845 = vmatpush1.msra.mxu0 %v843
        %846 = vmatprep.subr.mxu0 0.0
        %847 = vmatpush1.msra.mxu0 %v842
        %848 = vmatprep.subr.mxu0 0.0
        %849 = vmatpush1.msra.mxu0 %v841
        %850 = vmatprep.subr.mxu0 0.0
        %851 = vmatpush1.msra.mxu0 %v840
        %852 = vmatprep.subr.mxu0 0.0
        %853 = vmatpush1.msra.mxu0 %v839
        %854 = vmatprep.subr.mxu0 0.0
        %855 = vmatpush1.msra.mxu0 %v838
        %856 = vmatprep.subr.mxu0 0.0
        %857 = vmatpush1.msra.mxu0 %v837
        %858 = vmatprep.subr.mxu0 0.0
        %859 = vmatpush1.msra.mxu0 %v836
        %860 = vmatprep.subr.mxu0 0.0
        %861 = vmatpush1.msra.mxu0 %v835
        %862 = vmatprep.subr.mxu0 0.0
        %863 = vmatpush1.msra.mxu0 %v834
        %864 = vmatprep.subr.mxu0 0.0
        %865 = vmatpush1.msra.mxu0 %v833
        %866 = vmatprep.subr.mxu0 0.0
        %867 = vmatpush1.msra.mxu0 %v832
        %868 = vmatprep.subr.mxu0 0.0
        %869 = vmatpush1.msra.mxu0 %v831
        %870 = vmatprep.subr.mxu0 0.0
        %871 = vmatpush1.msra.mxu0 %v830
        %872 = vmatprep.subr.mxu0 0.0
        %873 = vmatpush1.msra.mxu0 %v829
        %874 = vmatprep.subr.mxu0 0.0
        %875 = vmatpush1.msra.mxu0 %v828
        %876 = vmatprep.subr.mxu0 0.0
        %877 = vmatpush2.msra.mxu0 0.0
        %878 = vmatprep.subr.mxu0 0.0
        %879 = vmatpush2.msra.mxu0 0.0
        %880 = vmatprep.subr.mxu0 0.0
        %881 = vmatpush2.msra.mxu0 0.0
        %882 = vmatprep.subr.mxu0 0.0
        %883 = vmatpush2.msra.mxu0 0.0
        %884 = vmatprep.subr.mxu0 0.0
        %885 = vmatpush2.msra.mxu0 0.0
        %886 = vmatprep.subr.mxu0 0.0
        %887 = vmatpush2.msra.mxu0 0.0
        %888 = vmatprep.subr.mxu0 0.0
        %889 = vmatpush2.msra.mxu0 0.0
        %890 = vmatprep.subr.mxu0 0.0
        %891 = vmatpush2.msra.mxu0 0.0
        %892 = vmatprep.subr.mxu0 0.0
        %893 = vmatpush2.msra.mxu0 0.0
        %894 = vmatprep.subr.mxu0 0.0
        %895 = vmatpush2.msra.mxu0 0.0
        %896 = vmatprep.subr.mxu0 0.0
        %897 = vmatpush2.msra.mxu0 0.0
        %898 = vmatprep.subr.mxu0 0.0
        %899 = vmatpush2.msra.mxu0 0.0
        %900 = vmatprep.subr.mxu0 0.0
        %901 = vmatpush2.msra.mxu0 0.0
        %902 = vmatprep.subr.mxu0 0.0
        %903 = vmatpush2.msra.mxu0 0.0
        %904 = vmatprep.subr.mxu0 0.0
        %905 = vmatpush2.msra.mxu0 0.0
        %906 = vmatprep.subr.mxu0 0.0
        %907 = vmatpush2.msra.mxu0 0.0
        %908 = vmatprep.mubr.f32.mxu0 0.0
        %909 = vmatmul.mubr.f32.gmra.mxu0 %v821
        %v910 = vpop.f32.mrf.mxu0
        %v911 = vadd.f32 0.0, %v910
        %v912 = vpop.f32.mrf.mxu0
        %913 = vdwg.mxu0
        %v914 = vadd.f32 %v827, %v911
        %s915 = scalar_lea.vmem [#allocation4], 16
        %916 = vst [vmem:[%s915] sm:$0xff] %v914
        %s917 = scalar_lea.vmem [#allocation3], 24
        %918 = vst [vmem:[%s917] sm:$0xff] %v914
        %s919 = scalar_lea.vmem [#allocation2], 24
        %v920 = vld [vmem:[%s919] sm:$0xff]
        %v921 = vld [vmem:[#allocation12] sm:$0xff]
        %v922 = vld [vmem:[#allocation12 + $0x8] sm:$0xff]
        %v923 = vld [vmem:[#allocation12 + $0x10] sm:$0xff]
        %v924 = vld [vmem:[#allocation12 + $0x18] sm:$0xff]
        %v925 = vld [vmem:[#allocation12 + $0x20] sm:$0xff]
        %v926 = vld [vmem:[#allocation12 + $0x28] sm:$0xff]
        %v927 = vld [vmem:[#allocation12 + $0x30] sm:$0xff]
        %v928 = vld [vmem:[#allocation12 + $0x38] sm:$0xff]
        %v929 = vld [vmem:[#allocation12 + $0x40] sm:$0xff]
        %v930 = vld [vmem:[#allocation12 + $0x48] sm:$0xff]
        %v931 = vld [vmem:[#allocation12 + $0x50] sm:$0xff]
        %v932 = vld [vmem:[#allocation12 + $0x58] sm:$0xff]
        %v933 = vld [vmem:[#allocation12 + $0x60] sm:$0xff]
        %v934 = vld [vmem:[#allocation12 + $0x68] sm:$0xff]
        %v935 = vld [vmem:[#allocation12 + $0x70] sm:$0xff]
        %v936 = vld [vmem:[#allocation12 + $0x78] sm:$0xff]
        %937 = vmatprep.subr.mxu0 0.0
        %938 = vmatpush1.msra.mxu0 %v936
        %939 = vmatprep.subr.mxu0 0.0
        %940 = vmatpush1.msra.mxu0 %v935
        %941 = vmatprep.subr.mxu0 0.0
        %942 = vmatpush1.msra.mxu0 %v934
        %943 = vmatprep.subr.mxu0 0.0
        %944 = vmatpush1.msra.mxu0 %v933
        %945 = vmatprep.subr.mxu0 0.0
        %946 = vmatpush1.msra.mxu0 %v932
        %947 = vmatprep.subr.mxu0 0.0
        %948 = vmatpush1.msra.mxu0 %v931
        %949 = vmatprep.subr.mxu0 0.0
        %950 = vmatpush1.msra.mxu0 %v930
        %951 = vmatprep.subr.mxu0 0.0
        %952 = vmatpush1.msra.mxu0 %v929
        %953 = vmatprep.subr.mxu0 0.0
        %954 = vmatpush1.msra.mxu0 %v928
        %955 = vmatprep.subr.mxu0 0.0
        %956 = vmatpush1.msra.mxu0 %v927
        %957 = vmatprep.subr.mxu0 0.0
        %958 = vmatpush1.msra.mxu0 %v926
        %959 = vmatprep.subr.mxu0 0.0
        %960 = vmatpush1.msra.mxu0 %v925
        %961 = vmatprep.subr.mxu0 0.0
        %962 = vmatpush1.msra.mxu0 %v924
        %963 = vmatprep.subr.mxu0 0.0
        %964 = vmatpush1.msra.mxu0 %v923
        %965 = vmatprep.subr.mxu0 0.0
        %966 = vmatpush1.msra.mxu0 %v922
        %967 = vmatprep.subr.mxu0 0.0
        %968 = vmatpush1.msra.mxu0 %v921
        %969 = vmatprep.subr.mxu0 0.0
        %970 = vmatpush2.msra.mxu0 0.0
        %971 = vmatprep.subr.mxu0 0.0
        %972 = vmatpush2.msra.mxu0 0.0
        %973 = vmatprep.subr.mxu0 0.0
        %974 = vmatpush2.msra.mxu0 0.0
        %975 = vmatprep.subr.mxu0 0.0
        %976 = vmatpush2.msra.mxu0 0.0
        %977 = vmatprep.subr.mxu0 0.0
        %978 = vmatpush2.msra.mxu0 0.0
        %979 = vmatprep.subr.mxu0 0.0
        %980 = vmatpush2.msra.mxu0 0.0
        %981 = vmatprep.subr.mxu0 0.0
        %982 = vmatpush2.msra.mxu0 0.0
        %983 = vmatprep.subr.mxu0 0.0
        %984 = vmatpush2.msra.mxu0 0.0
        %985 = vmatprep.subr.mxu0 0.0
        %986 = vmatpush2.msra.mxu0 0.0
        %987 = vmatprep.subr.mxu0 0.0
        %988 = vmatpush2.msra.mxu0 0.0
        %989 = vmatprep.subr.mxu0 0.0
        %990 = vmatpush2.msra.mxu0 0.0
        %991 = vmatprep.subr.mxu0 0.0
        %992 = vmatpush2.msra.mxu0 0.0
        %993 = vmatprep.subr.mxu0 0.0
        %994 = vmatpush2.msra.mxu0 0.0
        %995 = vmatprep.subr.mxu0 0.0
        %996 = vmatpush2.msra.mxu0 0.0
        %997 = vmatprep.subr.mxu0 0.0
        %998 = vmatpush2.msra.mxu0 0.0
        %999 = vmatprep.subr.mxu0 0.0
        %1000 = vmatpush2.msra.mxu0 0.0
        %1001 = vmatprep.mubr.f32.mxu0 0.0
        %1002 = vmatmul.mubr.f32.gmra.mxu0 %v914
        %v1003 = vpop.f32.mrf.mxu0
        %v1004 = vadd.f32 0.0, %v1003
        %v1005 = vpop.f32.mrf.mxu0
        %1006 = vdwg.mxu0
        %v1007 = vadd.f32 %v920, %v1004
        %s1008 = scalar_lea.vmem [#allocation4], 24
        %1009 = vst [vmem:[%s1008] sm:$0xff] %v1007
        %1010 = vst [vmem:[#allocation5] sm:$0xff] %v1007
        %1011 = vst [vmem:[#allocation19] sm:$0xff] %v1007
        %v1012 = vld [vmem:[#allocation3] sm:$0xff]
        %v1013 = vld [vmem:[#allocation3 + $0x8] sm:$0xff]
        %v1014 = vld [vmem:[#allocation3 + $0x10] sm:$0xff]
        %v1015 = vld [vmem:[#allocation3 + $0x18] sm:$0xff]
        %v1016 = vld [vmem:[#allocation4] sm:$0xff]
        %v1017 = vld [vmem:[#allocation4 + $0x8] sm:$0xff]
        %v1018 = vld [vmem:[#allocation4 + $0x10] sm:$0xff]
        %v1019 = vld [vmem:[#allocation4 + $0x18] sm:$0xff]
        %v1020 = vld [vmem:[#allocation14] sm:$0xff]
        %v1021 = vld [vmem:[#allocation14 + $0x8] sm:$0xff]
        %v1022 = vld [vmem:[#allocation14 + $0x10] sm:$0xff]
        %v1023 = vld [vmem:[#allocation14 + $0x18] sm:$0xff]
        %v1024 = vld [vmem:[#allocation14 + $0x20] sm:$0xff]
        %v1025 = vld [vmem:[#allocation14 + $0x28] sm:$0xff]
        %v1026 = vld [vmem:[#allocation14 + $0x30] sm:$0xff]
        %v1027 = vld [vmem:[#allocation14 + $0x38] sm:$0xff]
        %v1028 = vld [vmem:[#allocation14 + $0x40] sm:$0xff]
        %v1029 = vld [vmem:[#allocation14 + $0x48] sm:$0xff]
        %v1030 = vld [vmem:[#allocation14 + $0x50] sm:$0xff]
        %v1031 = vld [vmem:[#allocation14 + $0x58] sm:$0xff]
        %v1032 = vld [vmem:[#allocation14 + $0x60] sm:$0xff]
        %v1033 = vld [vmem:[#allocation14 + $0x68] sm:$0xff]
        %v1034 = vld [vmem:[#allocation14 + $0x70] sm:$0xff]
        %v1035 = vld [vmem:[#allocation14 + $0x78] sm:$0xff]
        %1036 = vmatprep.subr.mxu0 0.0
        %1037 = vmatpush1.msra.mxu0 %v1035
        %1038 = vmatprep.subr.mxu0 0.0
        %1039 = vmatpush1.msra.mxu0 %v1034
        %1040 = vmatprep.subr.mxu0 0.0
        %1041 = vmatpush1.msra.mxu0 %v1033
        %1042 = vmatprep.subr.mxu0 0.0
        %1043 = vmatpush1.msra.mxu0 %v1032
        %1044 = vmatprep.subr.mxu0 0.0
        %1045 = vmatpush1.msra.mxu0 %v1031
        %1046 = vmatprep.subr.mxu0 0.0
        %1047 = vmatpush1.msra.mxu0 %v1030
        %1048 = vmatprep.subr.mxu0 0.0
        %1049 = vmatpush1.msra.mxu0 %v1029
        %1050 = vmatprep.subr.mxu0 0.0
        %1051 = vmatpush1.msra.mxu0 %v1028
        %1052 = vmatprep.subr.mxu0 0.0
        %1053 = vmatpush1.msra.mxu0 %v1027
        %1054 = vmatprep.subr.mxu0 0.0
        %1055 = vmatpush1.msra.mxu0 %v1026
        %1056 = vmatprep.subr.mxu0 0.0
        %1057 = vmatpush1.msra.mxu0 %v1025
        %1058 = vmatprep.subr.mxu0 0.0
        %1059 = vmatpush1.msra.mxu0 %v1024
        %1060 = vmatprep.subr.mxu0 0.0
        %1061 = vmatpush1.msra.mxu0 %v1023
        %1062 = vmatprep.subr.mxu0 0.0
        %1063 = vmatpush1.msra.mxu0 %v1022
        %1064 = vmatprep.subr.mxu0 0.0
        %1065 = vmatpush1.msra.mxu0 %v1021
        %1066 = vmatprep.subr.mxu0 0.0
        %1067 = vmatpush1.msra.mxu0 %v1020
        %1068 = vmatprep.subr.mxu0 0.0
        %1069 = vmatpush2.msra.mxu0 0.0
        %1070 = vmatprep.subr.mxu0 0.0
        %1071 = vmatpush2.msra.mxu0 0.0
        %1072 = vmatprep.subr.mxu0 0.0
        %1073 = vmatpush2.msra.mxu0 0.0
        %1074 = vmatprep.subr.mxu0 0.0
        %1075 = vmatpush2.msra.mxu0 0.0
        %1076 = vmatprep.subr.mxu0 0.0
        %1077 = vmatpush2.msra.mxu0 0.0
        %1078 = vmatprep.subr.mxu0 0.0
        %1079 = vmatpush2.msra.mxu0 0.0
        %1080 = vmatprep.subr.mxu0 0.0
        %1081 = vmatpush2.msra.mxu0 0.0
        %1082 = vmatprep.subr.mxu0 0.0
        %1083 = vmatpush2.msra.mxu0 0.0
        %1084 = vmatprep.subr.mxu0 0.0
        %1085 = vmatpush2.msra.mxu0 0.0
        %1086 = vmatprep.subr.mxu0 0.0
        %1087 = vmatpush2.msra.mxu0 0.0
        %1088 = vmatprep.subr.mxu0 0.0
        %1089 = vmatpush2.msra.mxu0 0.0
        %1090 = vmatprep.subr.mxu0 0.0
        %1091 = vmatpush2.msra.mxu0 0.0
        %1092 = vmatprep.subr.mxu0 0.0
        %1093 = vmatpush2.msra.mxu0 0.0
        %1094 = vmatprep.subr.mxu0 0.0
        %1095 = vmatpush2.msra.mxu0 0.0
        %1096 = vmatprep.subr.mxu0 0.0
        %1097 = vmatpush2.msra.mxu0 0.0
        %1098 = vmatprep.subr.mxu0 0.0
        %1099 = vmatpush2.msra.mxu0 0.0
        %1100 = vmatprep.mubr.f32.mxu0 0.0
        %1101 = vmatmul.mubr.f32.gmra.mxu0 %v1012
        %v1102 = vpop.f32.mrf.mxu0
        %v1103 = vadd.f32 0.0, %v1102
        %v1104 = vpop.f32.mrf.mxu0
        %1105 = vmatprep.mubr.f32.mxu0 0.0
        %1106 = vmatmul.mubr.f32.gmra.mxu0 %v1013
        %v1107 = vpop.f32.mrf.mxu0
        %v1108 = vadd.f32 0.0, %v1107
        %v1109 = vpop.f32.mrf.mxu0
        %1110 = vmatprep.mubr.f32.mxu0 0.0
        %1111 = vmatmul.mubr.f32.gmra.mxu0 %v1014
        %v1112 = vpop.f32.mrf.mxu0
        %v1113 = vadd.f32 0.0, %v1112
        %v1114 = vpop.f32.mrf.mxu0
        %1115 = vmatprep.mubr.f32.mxu0 0.0
        %1116 = vmatmul.mubr.f32.gmra.mxu0 %v1015
        %v1117 = vpop.f32.mrf.mxu0
        %v1118 = vadd.f32 0.0, %v1117
        %v1119 = vpop.f32.mrf.mxu0
        %1120 = vdwg.mxu0
        %v1121 = vadd.f32 %v616, %v1103
        %v1122 = vadd.f32 %v622, %v1108
        %v1123 = vadd.f32 %v628, %v1113
        %v1124 = vadd.f32 %v634, %v1118
        %v1125 = vld [vmem:[#allocation15] sm:$0xff]
        %v1126 = vld [vmem:[#allocation15 + $0x8] sm:$0xff]
        %v1127 = vld [vmem:[#allocation15 + $0x10] sm:$0xff]
        %v1128 = vld [vmem:[#allocation15 + $0x18] sm:$0xff]
        %v1129 = vld [vmem:[#allocation15 + $0x20] sm:$0xff]
        %v1130 = vld [vmem:[#allocation15 + $0x28] sm:$0xff]
        %v1131 = vld [vmem:[#allocation15 + $0x30] sm:$0xff]
        %v1132 = vld [vmem:[#allocation15 + $0x38] sm:$0xff]
        %v1133 = vld [vmem:[#allocation15 + $0x40] sm:$0xff]
        %v1134 = vld [vmem:[#allocation15 + $0x48] sm:$0xff]
        %v1135 = vld [vmem:[#allocation15 + $0x50] sm:$0xff]
        %v1136 = vld [vmem:[#allocation15 + $0x58] sm:$0xff]
        %v1137 = vld [vmem:[#allocation15 + $0x60] sm:$0xff]
        %v1138 = vld [vmem:[#allocation15 + $0x68] sm:$0xff]
        %v1139 = vld [vmem:[#allocation15 + $0x70] sm:$0xff]
        %v1140 = vld [vmem:[#allocation15 + $0x78] sm:$0xff]
        %v1141 = vld [vmem:[#allocation17] sm:$0xff]
        %v1142 = vld [vmem:[#allocation17 + $0x8] sm:$0xff]
        %v1143 = vld [vmem:[#allocation17 + $0x10] sm:$0xff]
        %v1144 = vld [vmem:[#allocation17 + $0x18] sm:$0xff]
        %v1145 = vld [vmem:[#allocation17 + $0x20] sm:$0xff]
        %v1146 = vld [vmem:[#allocation17 + $0x28] sm:$0xff]
        %v1147 = vld [vmem:[#allocation17 + $0x30] sm:$0xff]
        %v1148 = vld [vmem:[#allocation17 + $0x38] sm:$0xff]
        %v1149 = vld [vmem:[#allocation17 + $0x40] sm:$0xff]
        %v1150 = vld [vmem:[#allocation17 + $0x48] sm:$0xff]
        %v1151 = vld [vmem:[#allocation17 + $0x50] sm:$0xff]
        %v1152 = vld [vmem:[#allocation17 + $0x58] sm:$0xff]
        %v1153 = vld [vmem:[#allocation17 + $0x60] sm:$0xff]
        %v1154 = vld [vmem:[#allocation17 + $0x68] sm:$0xff]
        %v1155 = vld [vmem:[#allocation17 + $0x70] sm:$0xff]
        %v1156 = vld [vmem:[#allocation17 + $0x78] sm:$0xff]
        %1157 = vmatprep.subr.mxu0 0.0
        %1158 = vmatpush1.msra.mxu0 %v1156
        %1159 = vmatprep.subr.mxu0 0.0
        %1160 = vmatpush1.msra.mxu0 %v1155
        %1161 = vmatprep.subr.mxu0 0.0
        %1162 = vmatpush1.msra.mxu0 %v1154
        %1163 = vmatprep.subr.mxu0 0.0
        %1164 = vmatpush1.msra.mxu0 %v1153
        %1165 = vmatprep.subr.mxu0 0.0
        %1166 = vmatpush1.msra.mxu0 %v1152
        %1167 = vmatprep.subr.mxu0 0.0
        %1168 = vmatpush1.msra.mxu0 %v1151
        %1169 = vmatprep.subr.mxu0 0.0
        %1170 = vmatpush1.msra.mxu0 %v1150
        %1171 = vmatprep.subr.mxu0 0.0
        %1172 = vmatpush1.msra.mxu0 %v1149
        %1173 = vmatprep.subr.mxu0 0.0
        %1174 = vmatpush1.msra.mxu0 %v1148
        %1175 = vmatprep.subr.mxu0 0.0
        %1176 = vmatpush1.msra.mxu0 %v1147
        %1177 = vmatprep.subr.mxu0 0.0
        %1178 = vmatpush1.msra.mxu0 %v1146
        %1179 = vmatprep.subr.mxu0 0.0
        %1180 = vmatpush1.msra.mxu0 %v1145
        %1181 = vmatprep.subr.mxu0 0.0
        %1182 = vmatpush1.msra.mxu0 %v1144
        %1183 = vmatprep.subr.mxu0 0.0
        %1184 = vmatpush1.msra.mxu0 %v1143
        %1185 = vmatprep.subr.mxu0 0.0
        %1186 = vmatpush1.msra.mxu0 %v1142
        %1187 = vmatprep.subr.mxu0 0.0
        %1188 = vmatpush1.msra.mxu0 %v1141
        %1189 = vmatprep.subr.mxu0 0.0
        %1190 = vmatpush2.msra.mxu0 0.0
        %1191 = vmatprep.subr.mxu0 0.0
        %1192 = vmatpush2.msra.mxu0 0.0
        %1193 = vmatprep.subr.mxu0 0.0
        %1194 = vmatpush2.msra.mxu0 0.0
        %1195 = vmatprep.subr.mxu0 0.0
        %1196 = vmatpush2.msra.mxu0 0.0
        %1197 = vmatprep.subr.mxu0 0.0
        %1198 = vmatpush2.msra.mxu0 0.0
        %1199 = vmatprep.subr.mxu0 0.0
        %1200 = vmatpush2.msra.mxu0 0.0
        %1201 = vmatprep.subr.mxu0 0.0
        %1202 = vmatpush2.msra.mxu0 0.0
        %1203 = vmatprep.subr.mxu0 0.0
        %1204 = vmatpush2.msra.mxu0 0.0
        %1205 = vmatprep.subr.mxu0 0.0
        %1206 = vmatpush2.msra.mxu0 0.0
        %1207 = vmatprep.subr.mxu0 0.0
        %1208 = vmatpush2.msra.mxu0 0.0
        %1209 = vmatprep.subr.mxu0 0.0
        %1210 = vmatpush2.msra.mxu0 0.0
        %1211 = vmatprep.subr.mxu0 0.0
        %1212 = vmatpush2.msra.mxu0 0.0
        %1213 = vmatprep.subr.mxu0 0.0
        %1214 = vmatpush2.msra.mxu0 0.0
        %1215 = vmatprep.subr.mxu0 0.0
        %1216 = vmatpush2.msra.mxu0 0.0
        %1217 = vmatprep.subr.mxu0 0.0
        %1218 = vmatpush2.msra.mxu0 0.0
        %1219 = vmatprep.subr.mxu0 0.0
        %1220 = vmatpush2.msra.mxu0 0.0
        %1221 = vmatprep.mubr.f32.mxu0 0.0
        %1222 = vmatmul.mubr.f32.gmra.mxu0 %v1121
        %v1223 = vpop.f32.mrf.mxu0
        %v1224 = vadd.f32 0.0, %v1223
        %v1225 = vpop.f32.mrf.mxu0
        %1226 = vmatprep.mubr.f32.mxu0 0.0
        %1227 = vmatmul.mubr.f32.gmra.mxu0 %v1122
        %v1228 = vpop.f32.mrf.mxu0
        %v1229 = vadd.f32 0.0, %v1228
        %v1230 = vpop.f32.mrf.mxu0
        %1231 = vmatprep.mubr.f32.mxu0 0.0
        %1232 = vmatmul.mubr.f32.gmra.mxu0 %v1123
        %v1233 = vpop.f32.mrf.mxu0
        %v1234 = vadd.f32 0.0, %v1233
        %v1235 = vpop.f32.mrf.mxu0
        %1236 = vmatprep.mubr.f32.mxu0 0.0
        %1237 = vmatmul.mubr.f32.gmra.mxu0 %v1124
        %v1238 = vpop.f32.mrf.mxu0
        %v1239 = vadd.f32 0.0, %v1238
        %v1240 = vpop.f32.mrf.mxu0
        %1241 = vdwg.mxu0
        %1242 = vmatprep.subr.mxu0 0.0
        %1243 = vmatpush1.msra.mxu0 %v1140
        %1244 = vmatprep.subr.mxu0 0.0
        %1245 = vmatpush1.msra.mxu0 %v1139
        %1246 = vmatprep.subr.mxu0 0.0
        %1247 = vmatpush1.msra.mxu0 %v1138
        %1248 = vmatprep.subr.mxu0 0.0
        %1249 = vmatpush1.msra.mxu0 %v1137
        %1250 = vmatprep.subr.mxu0 0.0
        %1251 = vmatpush1.msra.mxu0 %v1136
        %1252 = vmatprep.subr.mxu0 0.0
        %1253 = vmatpush1.msra.mxu0 %v1135
        %1254 = vmatprep.subr.mxu0 0.0
        %1255 = vmatpush1.msra.mxu0 %v1134
        %1256 = vmatprep.subr.mxu0 0.0
        %1257 = vmatpush1.msra.mxu0 %v1133
        %1258 = vmatprep.subr.mxu0 0.0
        %1259 = vmatpush1.msra.mxu0 %v1132
        %1260 = vmatprep.subr.mxu0 0.0
        %1261 = vmatpush1.msra.mxu0 %v1131
        %1262 = vmatprep.subr.mxu0 0.0
        %1263 = vmatpush1.msra.mxu0 %v1130
        %1264 = vmatprep.subr.mxu0 0.0
        %1265 = vmatpush1.msra.mxu0 %v1129
        %1266 = vmatprep.subr.mxu0 0.0
        %1267 = vmatpush1.msra.mxu0 %v1128
        %1268 = vmatprep.subr.mxu0 0.0
        %1269 = vmatpush1.msra.mxu0 %v1127
        %1270 = vmatprep.subr.mxu0 0.0
        %1271 = vmatpush1.msra.mxu0 %v1126
        %1272 = vmatprep.subr.mxu0 0.0
        %1273 = vmatpush1.msra.mxu0 %v1125
        %1274 = vmatprep.subr.mxu0 0.0
        %1275 = vmatpush2.msra.mxu0 0.0
        %1276 = vmatprep.subr.mxu0 0.0
        %1277 = vmatpush2.msra.mxu0 0.0
        %1278 = vmatprep.subr.mxu0 0.0
        %1279 = vmatpush2.msra.mxu0 0.0
        %1280 = vmatprep.subr.mxu0 0.0
        %1281 = vmatpush2.msra.mxu0 0.0
        %1282 = vmatprep.subr.mxu0 0.0
        %1283 = vmatpush2.msra.mxu0 0.0
        %1284 = vmatprep.subr.mxu0 0.0
        %1285 = vmatpush2.msra.mxu0 0.0
        %1286 = vmatprep.subr.mxu0 0.0
        %1287 = vmatpush2.msra.mxu0 0.0
        %1288 = vmatprep.subr.mxu0 0.0
        %1289 = vmatpush2.msra.mxu0 0.0
        %1290 = vmatprep.subr.mxu0 0.0
        %1291 = vmatpush2.msra.mxu0 0.0
        %1292 = vmatprep.subr.mxu0 0.0
        %1293 = vmatpush2.msra.mxu0 0.0
        %1294 = vmatprep.subr.mxu0 0.0
        %1295 = vmatpush2.msra.mxu0 0.0
        %1296 = vmatprep.subr.mxu0 0.0
        %1297 = vmatpush2.msra.mxu0 0.0
        %1298 = vmatprep.subr.mxu0 0.0
        %1299 = vmatpush2.msra.mxu0 0.0
        %1300 = vmatprep.subr.mxu0 0.0
        %1301 = vmatpush2.msra.mxu0 0.0
        %1302 = vmatprep.subr.mxu0 0.0
        %1303 = vmatpush2.msra.mxu0 0.0
        %1304 = vmatprep.subr.mxu0 0.0
        %1305 = vmatpush2.msra.mxu0 0.0
        %1306 = vmatprep.mubr.f32.mxu0 0.0
        %1307 = vmatmul.mubr.f32.gmra.mxu0 %v1016
        %v1308 = vpop.f32.mrf.mxu0
        %v1309 = vadd.f32 %v1224, %v1308
        %v1310 = vpop.f32.mrf.mxu0
        %1311 = vmatprep.mubr.f32.mxu0 0.0
        %1312 = vmatmul.mubr.f32.gmra.mxu0 %v1017
        %v1313 = vpop.f32.mrf.mxu0
        %v1314 = vadd.f32 %v1229, %v1313
        %v1315 = vpop.f32.mrf.mxu0
        %1316 = vmatprep.mubr.f32.mxu0 0.0
        %1317 = vmatmul.mubr.f32.gmra.mxu0 %v1018
        %v1318 = vpop.f32.mrf.mxu0
        %v1319 = vadd.f32 %v1234, %v1318
        %v1320 = vpop.f32.mrf.mxu0
        %1321 = vmatprep.mubr.f32.mxu0 0.0
        %1322 = vmatmul.mubr.f32.gmra.mxu0 %v1019
        %v1323 = vpop.f32.mrf.mxu0
        %v1324 = vadd.f32 %v1239, %v1323
        %v1325 = vpop.f32.mrf.mxu0
        %1326 = vdwg.mxu0
        %v1327 = vld [vmem:[%s8] sm:$0x1]
        %v1329 = vlaneseq
        %v1330 = vshrl.u32 %v1329, 7
        %v1331 = vsub.s32 0, %v1330
        %v1332 = vrot.slane %v1327, %v1331
        %v1334 = vadd.f32 %v1309, %v1332
        %v1335 = vadd.f32 %v1314, %v1332
        %v1336 = vadd.f32 %v1319, %v1332
        %v1337 = vadd.f32 %v1324, %v1332
        %v1338 = vlaneseq
        %v1339 = vand.u32 %v1338, 127
        %vm1340 = vcmp.lt.s32.totalorder %v1339, 16
        %v1341 = vsel %vm1340, 1, 0
        %vm1342 = vcmp.eq.s32.totalorder %v1341, 1
        %v1343 = vsel %vm1342, %v1334, -1e+30
        %v1344 = vsel %vm1342, %v1335, -1e+30
        %v1345 = vsel %vm1342, %v1336, -1e+30
        %v1346 = vsel %vm1342, %v1337, -1e+30
        %1347 = vmax.xlane.f32.xlu0 %v1343
        %v1348 = vpop.xlane.xlu0 %1347
        %1349 = vmax.xlane.f32.xlu0 %v1344
        %v1350 = vpop.xlane.xlu0 %1349
        %1351 = vmax.xlane.f32.xlu0 %v1345
        %v1352 = vpop.xlane.xlu0 %1351
        %1353 = vmax.xlane.f32.xlu0 %v1346
        %v1354 = vpop.xlane.xlu0 %1353
        %v1355 = vsub.f32 %v1343, %v1348
        %v1356 = vsub.f32 %v1344, %v1350
        %v1357 = vsub.f32 %v1345, %v1352
        %v1358 = vsub.f32 %v1346, %v1354
        %v1359 = vmul.f32 %v1355, 1.442695
        %v1360 = vpow.pop %v1359
        %v1361 = vmul.f32 %v1356, 1.442695
        %v1362 = vpow.pop %v1361
        %v1363 = vmul.f32 %v1357, 1.442695
        %v1364 = vpow.pop %v1363
        %v1365 = vmul.f32 %v1358, 1.442695
        %v1366 = vpow.pop %v1365
        %1367 = vadd.xlane.f32.xlu0 %v1360
        %v1368 = vpop.xlane.xlu0 %1367
        %1369 = vadd.xlane.f32.xlu0 %v1362
        %v1370 = vpop.xlane.xlu0 %1369
        %1371 = vadd.xlane.f32.xlu0 %v1364
        %v1372 = vpop.xlane.xlu0 %1371
        %1373 = vadd.xlane.f32.xlu0 %v1366
        %v1374 = vpop.xlane.xlu0 %1373
        %v1375 = vlog2.pop %v1368
        %v1376 = vmul.f32 %v1375, 0.6931472
        %v1377 = vlog2.pop %v1370
        %v1378 = vmul.f32 %v1377, 0.6931472
        %v1379 = vlog2.pop %v1372
        %v1380 = vmul.f32 %v1379, 0.6931472
        %v1381 = vlog2.pop %v1374
        %v1382 = vmul.f32 %v1381, 0.6931472
        %v1383 = vsub.f32 %v1355, %v1376
        %v1384 = vsub.f32 %v1356, %v1378
        %v1385 = vsub.f32 %v1357, %v1380
        %v1386 = vsub.f32 %v1358, %v1382
        %1387 = vst [vmem:[%s488] sm:$0xff] %v1383
        %1388 = vst [vmem:[%s488 + $0x8] sm:$0xff] %v1384
        %1389 = vst [vmem:[%s488 + $0x10] sm:$0xff] %v1385
        %1390 = vst [vmem:[%s488 + $0x18] sm:$0xff] %v1386
        %s1391 = sand.u32 %s255, 1
        %s1392 = scalar_lea.sflag [#allocation8], %s1391
        %s1393 = sand.u32 %s255, 1
        %s1394 = smul.addr %s1393, 32
        %s1395 = scalar_lea.vmem [#allocation18], %s1394
        // Predicated region
        $region89: #{tpu_custom_call.1} parent=55 // pred_check
          %p1396 = pneg %p265
        $region90: #{tpu_custom_call.1} parent=55 // pred_check_branch
          %1398 = sbr.rel (%p1396) target = $region92
        $region91: #{tpu_custom_call.1} parent=55 // pred_region
          %s1399 = smul.u32 4, %s37
          %s1401 = ssub.s32 512, 512
          %1402 = vsyncadd %s1392, %s1401
          %s1403 = sadd.s32 %s36, %s1399
          %s1404 = smul.addr %s1403, 128
          %s1405 = scalar_lea.hbm %s9, %s1404
          %s1406 = sshll.u32 %s1395, 4
          %s1407 = int_to_ptr.vmem [resolvable:$true] %s1406
          %1412 = dma.vmem_to_hbm [thread:$0]  %s1407, 512, %s1405, %s1392, 128, 128, 8
        $region92: #{tpu_custom_call.1} parent=55 // pred_fallthru
          _
        // Predicated region
        $region93: #{tpu_custom_call.1} parent=55 // pred_check
          %p1413 = pneg %p291
        $region94: #{tpu_custom_call.1} parent=55 // pred_check_branch
          %1415 = sbr.rel (%p1413) target = $region96
        $region95: #{tpu_custom_call.1} parent=55 // pred_region
          %s1417 = ssub.s32 128, 128
          %1418 = vsyncadd [#allocation20], %s1417
          %s1419 = smul.addr %s36, 128
          %s1420 = scalar_lea.hbm %s10, %s1419
          %s1422 = sshll.u32 [#allocation19], 4
          %s1423 = int_to_ptr.vmem [resolvable:$true] %s1422
          %1425 = dma.vmem_to_hbm [thread:$0]  %s1423, 128, %s1420, [#allocation20]
        $region96: #{tpu_custom_call.1} parent=55 // pred_fallthru
          _
        // Predicated region
        $region97: #{tpu_custom_call.1} parent=55 // pred_check
          %p1426 = pneg %p291
        $region98: #{tpu_custom_call.1} parent=55 // pred_check_branch
          %1428 = sbr.rel (%p1426) target = $region100
        $region99: #{tpu_custom_call.1} parent=55 // pred_region
          %1429 = dma.done [#allocation20], 128
        $region100: #{tpu_custom_call.1} parent=55 // pred_fallthru
          _
      $region56: #{tpu_custom_call.1} parent=5 // pred_fallthru
        _
      %p1430 = scmp.le.s32.totalorder 2, %s27
      // Predicated region
      $region101: #{tpu_custom_call.1} parent=5 // pred_check
        %p1431 = pneg %p1430
      $region102: #{tpu_custom_call.1} parent=5 // pred_check_branch
        %1433 = sbr.rel (%p1431) target = $region104
      $region103: #{tpu_custom_call.1} parent=5 // pred_region
        %s1434 = ssub.s32 %s27, 2
        // Predicated region
        $region105: #{tpu_custom_call.1} parent=103 // pred_check
          %p1435 = pneg %p271
        $region106: #{tpu_custom_call.1} parent=103 // pred_check_branch
          %1437 = sbr.rel (%p1435) target = $region108
        $region107: #{tpu_custom_call.1} parent=103 // pred_region
          %s1438 = sand.u32 %s256, 1
          %s1439 = scalar_lea.sflag [#allocation8], %s1438
          %s1440 = sand.u32 %s256, 1
          %s1441 = smul.addr %s1440, 32
          %s1442 = scalar_lea.vmem [#allocation18], %s1441
          %1443 = dma.done %s1439, 512
        $region108: #{tpu_custom_call.1} parent=103 // pred_fallthru
          _
      $region104: #{tpu_custom_call.1} parent=5 // pred_fallthru
        _
    $region6: #{tpu_custom_call.1} parent=1 // loop_footer
      %s31 = sadd.s32 1, %s27
    $region7: #{tpu_custom_call.1} parent=1 // loop_footer_branch
      %26 = sbr.rel target = $region3
    $region8: #{tpu_custom_call.1} parent=1 // loop_exit
      _
    %1444 = vsyncpa [#allocation7], 1
    %s1445 = scalar_lea.sflag [#allocation7], 1
    %1446 = vsyncpa %s1445, 1
    %1447 = vsyncpa [#allocation10], 1
    %1448 = vsyncpa [#allocation13], 1
    %1449 = vsyncpa [#allocation16], 1
    %1450 = vsyncpa [#allocation8], 1
    %s1451 = scalar_lea.sflag [#allocation8], 1
    %1452 = vsyncpa %s1451, 1
    %1453 = vsyncpa [#allocation20], 1

</llo_original>
